<compile_context>
chip_gen: v7x
topology: tpu7x:2x2x1
jax: 0.10.0
libtpu: 0.0.40
codegen_flags: <defaults>
</compile_context>

<pallas_src>
import jax
import jax.numpy as jnp
from jax.experimental import pallas as pl
from jax.experimental.pallas import tpu as pltpu


def _round_up(n, m):
    return ((n + m - 1) // m) * m


def _cdiv(a, b):
    return (a + b - 1) // b


def _chip_traits():
    """Generation-specific knobs derived from the local TPU."""
    kind = ""
    try:
        kind = jax.devices()[0].device_kind.lower()
    except Exception:
        pass
    is_v5 = "v5" in kind
    is_v7 = ("v7" in kind) or ("tpu7" in kind)
    # MXU tile: 128 on v5e (4x128x128), 256 on v6e/v7x (2x256x256).
    mxu_pad = 128 if is_v5 else 256
    # Physical VMEM per TensorCore.
    try:
        vmem_cap = int(pltpu.get_tpu_info().vmem_capacity_bytes)
    except Exception:
        vmem_cap = (64 if is_v7 else 128) * 1024 * 1024
    default_batch_tile = 256 if is_v7 else 512
    # v7x has 2 TensorCores per chip: want >=2 grid steps to shard across them.
    min_grid = 2 if is_v7 else 1
    return mxu_pad, vmem_cap, default_batch_tile, min_grid


def mlp_kernel(alphas_ref,                 # SMEM scalar-prefetch: (2,) PReLU slopes
               x_ref, w1_ref, b1_ref,      # VMEM tiles
               w2_ref, b2_ref,
               w3_ref, b3_ref,
               o_ref):
    a1 = alphas_ref[0]
    a2 = alphas_ref[1]

    x = x_ref[...]                                                   # (TB, Dp) bf16

    # Layer 1: Linear (MXU, bf16 in / f32 acc) + Dropout(identity, eval) + PReLU
    h = jnp.dot(x, w1_ref[...], preferred_element_type=jnp.float32)  # (TB, Hp) f32
    h = h + b1_ref[...]
    h = h * jnp.where(h > 0, jnp.float32(1.0), a1)                   # 1 select + 1 mul

    # Layer 2: Linear + Dropout(identity, eval) + PReLU
    h = jnp.dot(h.astype(jnp.bfloat16), w2_ref[...],
                preferred_element_type=jnp.float32)
    h = h + b2_ref[...]
    h = h * jnp.where(h > 0, jnp.float32(1.0), a2)

    # Layer 3: Linear (output head)
    out = jnp.dot(h.astype(jnp.bfloat16), w3_ref[...],
                  preferred_element_type=jnp.float32)
    out = out + b3_ref[...]
    o_ref[...] = out.astype(o_ref.dtype)


def pack_params(params, *, mxu_pad=None):
    """One-time weight/bias padding + bf16 cast (hoisted out of the forward)."""
    if mxu_pad is None:
        mxu_pad, _, _, _ = _chip_traits()
    d_in, H = params["w1"].shape
    d_out = params["w3"].shape[1]

    # Lane-dense, MXU-aligned dims.  Hidden dim (the K of layers 2/3) is padded
    # to the MXU tile (256 on v6e/v7x, 128 on v5e); the output head only needs
    # lane density (128); layer-1's K only needs the MXU tile when the real
    # input dim exceeds 128.
    Dp = _round_up(d_in, 128 if d_in <= 128 else mxu_pad)
    Hp = _round_up(H, mxu_pad)
    Op = _round_up(d_out, 128)

    def pad2(a, rows, cols, dtype):
        a = a.astype(dtype)
        return jnp.pad(a, ((0, rows - a.shape[0]), (0, cols - a.shape[1])))

    return {
        "w1": pad2(params["w1"], Dp, Hp, jnp.bfloat16),
        "w2": pad2(params["w2"], Hp, Hp, jnp.bfloat16),
        "w3": pad2(params["w3"], Hp, Op, jnp.bfloat16),
        "b1": pad2(params["b1"].reshape(1, -1), 1, Hp, jnp.float32),
        "b2": pad2(params["b2"].reshape(1, -1), 1, Hp, jnp.float32),
        "b3": pad2(params["b3"].reshape(1, -1), 1, Op, jnp.float32),
        "alphas": jnp.concatenate(
            [params["a1"].reshape(-1), params["a2"].reshape(-1)]
        ).astype(jnp.float32),
        "dims": (d_in, H, d_out, Dp, Hp, Op),
    }


def mlp_forward(x, packed, *, batch_tile=None):
    """x: (B, D_in) float32.  packed: output of pack_params()."""
    _, vmem_cap, default_bt, min_grid = _chip_traits()
    if batch_tile is None:
        batch_tile = default_bt

    d_in, H, d_out, Dp, Hp, Op = packed["dims"]
    B = x.shape[0]

    # Batch tiling: minimize padding (TB derived from B, not the other way
    # around), keep TB a multiple of 16 (bf16 sublane packing), and give the
    # two v7x TensorCores at least `min_grid` grid steps to share.
    Bp0 = _round_up(B, 16)
    nb = _cdiv(Bp0, batch_tile)
    if Bp0 >= min_grid * 16:
        nb = max(nb, min_grid)
    TB = _round_up(_cdiv(Bp0, nb), 16)
    Bp = nb * TB

    # Pad x directly in bf16 (no f32 staging buffer).
    xp = jnp.pad(x.astype(jnp.bfloat16), ((0, Bp - B), (0, Dp - d_in)))

    # Small hidden dims are HBM-streaming bound: write bf16 output and cast
    # back to f32 in the wrapper to halve the writeback traffic.
    out_dtype = jnp.bfloat16 if Hp <= 512 else jnp.float32
    out_bytes = 2 if out_dtype == jnp.bfloat16 else 4

    w1, b1 = packed["w1"], packed["b1"]
    w2, b2 = packed["w2"], packed["b2"]
    w3, b3 = packed["w3"], packed["b3"]
    alphas = packed["alphas"]

    # --- VMEM accounting & limit (weights single-buffered, x/out double). ---
    weight_bytes = (Dp * Hp + Hp * Hp + Hp * Op) * 2
    bias_bytes = (2 * Hp + Op) * 4
    stream_bytes = 2 * (TB * Dp * 2 + TB * Op * out_bytes)
    interm_bytes = 2 * TB * Hp * 4 + 2 * TB * Hp * 2 + TB * Op * 4
    need_vmem = weight_bytes + bias_bytes + stream_bytes + interm_bytes
    vmem_limit = min(max(int(1.5 * need_vmem), 32 * 1024 * 1024),
                     int(0.875 * vmem_cap))

    flops = 2 * Bp * (Dp * Hp + Hp * Hp + Hp * Op)
    hbm_bytes = weight_bytes + bias_bytes + Bp * Dp * 2 + Bp * Op * out_bytes
    cost = pl.CostEstimate(flops=flops, transcendentals=0,
                           bytes_accessed=hbm_bytes)

    # TODO(synk): when (w1+w2+w3) bf16 bytes approach the v7x 64 MiB budget
    # (Hp ~ 3-4K), fall back to a hidden-dim-tiled variant (second "arbitrary"
    # grid axis + f32 accumulator scratch) instead of the resident-weights layout.

    def run(single_buffer_weights):
        def resident(shape):
            if single_buffer_weights:
                return pl.BlockSpec(shape, lambda i, _a: (0, 0),
                                    pipeline_mode=pl.Buffered(1))
            return pl.BlockSpec(shape, lambda i, _a: (0, 0))

        grid_spec = pltpu.PrefetchScalarGridSpec(
            num_scalar_prefetch=1,
            grid=(nb,),
            in_specs=[
                pl.BlockSpec((TB, Dp), lambda i, _a: (i, 0)),   # x tile (streamed)
                resident((Dp, Hp)),   # w1 (VMEM-resident)
                resident((1, Hp)),    # b1
                resident((Hp, Hp)),   # w2
                resident((1, Hp)),    # b2
                resident((Hp, Op)),   # w3
                resident((1, Op)),    # b3
            ],
            out_specs=pl.BlockSpec((TB, Op), lambda i, _a: (i, 0)),
        )
        return pl.pallas_call(
            mlp_kernel,
            out_shape=jax.ShapeDtypeStruct((Bp, Op), out_dtype),
            grid_spec=grid_spec,
            compiler_params=pltpu.CompilerParams(
                dimension_semantics=("parallel",),
                vmem_limit_bytes=vmem_limit,
            ),
            cost_estimate=cost,
        )(alphas, xp, w1, b1, w2, b2, w3, b3)

    try:
        out_padded = run(True)    # weights single-buffered (constant index_map)
    except Exception:
        out_padded = run(False)   # conservative fallback: default buffering

    return out_padded[:B, :d_out].astype(jnp.float32)


def init_params(key, input_dim, hidden_dim, output_dim):
    """Deterministic init mimicking PyTorch Linear defaults (uniform +/- 1/sqrt(fan_in))."""
    ks = jax.random.split(key, 6)

    def linear(kw, kb, fan_in, fan_out):
        bound = 1.0 / jnp.sqrt(fan_in)
        w = jax.random.uniform(kw, (fan_in, fan_out), jnp.float32, -bound, bound)
        b = jax.random.uniform(kb, (1, fan_out), jnp.float32, -bound, bound)
        return w, b

    w1, b1 = linear(ks[0], ks[1], input_dim, hidden_dim)
    w2, b2 = linear(ks[2], ks[3], hidden_dim, hidden_dim)
    w3, b3 = linear(ks[4], ks[5], hidden_dim, output_dim)

    return {
        "w1": w1, "b1": b1,
        "w2": w2, "b2": b2,
        "w3": w3, "b3": b3,
        # PReLU default single-parameter slope = 0.25
        "a1": jnp.array([0.25], dtype=jnp.float32),
        "a2": jnp.array([0.25], dtype=jnp.float32),
    }


def mlp_reference(x, p):
    """Pure-JAX f32 reference for correctness check (dropout = eval identity)."""
    def prelu(h, a):
        return jnp.where(h > 0, h, a * h)
    h = prelu(x @ p["w1"] + p["b1"], p["a1"][0])
    h = prelu(h @ p["w2"] + p["b2"], p["a2"][0])
    return h @ p["w3"] + p["b3"]


if __name__ == "__main__":
    key = jax.random.PRNGKey(0)
    k_param, k_x = jax.random.split(key)

    batch, input_dim, hidden_dim, output_dim = 8, 16, 32, 4
    params = init_params(k_param, input_dim, hidden_dim, output_dim)
    packed = pack_params(params)          # one-time weight pad + bf16 cast (hoisted)
    x = jax.random.normal(k_x, (batch, input_dim), dtype=jnp.float32)

    out = mlp_forward(x, packed)
    out = jax.block_until_ready(out)

    ref = mlp_reference(x, params)
    assert out.shape == (batch, output_dim), out.shape
    # Kernel feeds the MXU with bf16 operands (f32 accumulation) and may write
    # bf16 output for the memory-bound regime, so compare with a bf16 tolerance.
    assert jnp.allclose(out, ref, atol=5e-2, rtol=5e-2), "mismatch vs reference"

    print("KERNEL_OK")
</pallas_src>

<mosaic_0001>
module attributes {stable_mosaic.version = 11 : i64} {
  func.func @mlp_kernel(%arg0: i32, %arg1: memref<2xf32, #tpu.memory_space<smem>>, %arg2: memref<16x128xbf16, #tpu.memory_space<vmem>>, %arg3: memref<128x256xbf16, #tpu.memory_space<vmem>>, %arg4: memref<1x256xf32, #tpu.memory_space<vmem>>, %arg5: memref<256x256xbf16, #tpu.memory_space<vmem>>, %arg6: memref<1x256xf32, #tpu.memory_space<vmem>>, %arg7: memref<256x128xbf16, #tpu.memory_space<vmem>>, %arg8: memref<1x128xf32, #tpu.memory_space<vmem>>, %arg9: memref<16x128xbf16, #tpu.memory_space<vmem>>) attributes {dimension_semantics = [#tpu.dimension_semantics<parallel>], iteration_bounds = array<i64: 1>, scalar_prefetch = 1 : i64, scratch_operands = 0 : i64, tpu.core_type = #tpu.core_type<tc>, window_params = [{transform_indices = @transform_0, window_bounds = array<i64: 16, 128>}, {pipeline_mode = #tpu.pipeline_mode<synchronous>, transform_indices = @transform_1, window_bounds = array<i64: 128, 256>}, {pipeline_mode = #tpu.pipeline_mode<synchronous>, transform_indices = @transform_2, window_bounds = array<i64: 1, 256>}, {pipeline_mode = #tpu.pipeline_mode<synchronous>, transform_indices = @transform_3, window_bounds = array<i64: 256, 256>}, {pipeline_mode = #tpu.pipeline_mode<synchronous>, transform_indices = @transform_4, window_bounds = array<i64: 1, 256>}, {pipeline_mode = #tpu.pipeline_mode<synchronous>, transform_indices = @transform_5, window_bounds = array<i64: 256, 128>}, {pipeline_mode = #tpu.pipeline_mode<synchronous>, transform_indices = @transform_6, window_bounds = array<i64: 1, 128>}, {transform_indices = @transform_7, window_bounds = array<i64: 16, 128>}]} {
    %c0 = arith.constant 0 : index
    %0 = memref.load %arg1[%c0] : memref<2xf32, #tpu.memory_space<smem>>
    %c1 = arith.constant 1 : index
    %1 = memref.load %arg1[%c1] : memref<2xf32, #tpu.memory_space<smem>>
    %c0_0 = arith.constant 0 : index
    %c0_1 = arith.constant 0 : index
    %2 = vector.load %arg2[%c0_0, %c0_1] : memref<16x128xbf16, #tpu.memory_space<vmem>>, vector<16x128xbf16>
    %c0_2 = arith.constant 0 : index
    %c0_3 = arith.constant 0 : index
    %3 = vector.load %arg3[%c0_2, %c0_3] : memref<128x256xbf16, #tpu.memory_space<vmem>>, vector<128x256xbf16>
    %cst = arith.constant dense<0.000000e+00> : vector<16x256xf32>
    %4 = tpu.matmul %2, %3, %cst {dimension_numbers = #tpu.dot_dimension_numbers<[1], [0], [0], [1], [0, 0, 1, 1], [], []>} : vector<16x128xbf16>, vector<128x256xbf16>, vector<16x256xf32> -> vector<16x256xf32>
    %c0_4 = arith.constant 0 : index
    %c0_5 = arith.constant 0 : index
    %5 = vector.load %arg4[%c0_4, %c0_5] : memref<1x256xf32, #tpu.memory_space<vmem>>, vector<1x256xf32>
    %6 = vector.broadcast %5 : vector<1x256xf32> to vector<16x256xf32>
    %7 = arith.addf %4, %6 : vector<16x256xf32>
    %cst_6 = arith.constant 0.000000e+00 : f32
    %8 = vector.broadcast %cst_6 : f32 to vector<16x256xf32>
    %9 = arith.cmpf ogt, %7, %8 : vector<16x256xf32>
    %cst_7 = arith.constant 1.000000e+00 : f32
    %10 = vector.broadcast %cst_7 : f32 to vector<16x256xf32>
    %11 = vector.broadcast %0 : f32 to vector<16x256xf32>
    %12 = arith.select %9, %10, %11 : vector<16x256xi1>, vector<16x256xf32>
    %13 = arith.mulf %7, %12 : vector<16x256xf32>
    %14 = arith.truncf %13 : vector<16x256xf32> to vector<16x256xbf16>
    %c0_8 = arith.constant 0 : index
    %c0_9 = arith.constant 0 : index
    %15 = vector.load %arg5[%c0_8, %c0_9] : memref<256x256xbf16, #tpu.memory_space<vmem>>, vector<256x256xbf16>
    %cst_10 = arith.constant dense<0.000000e+00> : vector<16x256xf32>
    %16 = tpu.matmul %14, %15, %cst_10 {dimension_numbers = #tpu.dot_dimension_numbers<[1], [0], [0], [1], [0, 0, 1, 1], [], []>} : vector<16x256xbf16>, vector<256x256xbf16>, vector<16x256xf32> -> vector<16x256xf32>
    %c0_11 = arith.constant 0 : index
    %c0_12 = arith.constant 0 : index
    %17 = vector.load %arg6[%c0_11, %c0_12] : memref<1x256xf32, #tpu.memory_space<vmem>>, vector<1x256xf32>
    %18 = vector.broadcast %17 : vector<1x256xf32> to vector<16x256xf32>
    %19 = arith.addf %16, %18 : vector<16x256xf32>
    %cst_13 = arith.constant 0.000000e+00 : f32
    %20 = vector.broadcast %cst_13 : f32 to vector<16x256xf32>
    %21 = arith.cmpf ogt, %19, %20 : vector<16x256xf32>
    %cst_14 = arith.constant 1.000000e+00 : f32
    %22 = vector.broadcast %cst_14 : f32 to vector<16x256xf32>
    %23 = vector.broadcast %1 : f32 to vector<16x256xf32>
    %24 = arith.select %21, %22, %23 : vector<16x256xi1>, vector<16x256xf32>
    %25 = arith.mulf %19, %24 : vector<16x256xf32>
    %26 = arith.truncf %25 : vector<16x256xf32> to vector<16x256xbf16>
    %c0_15 = arith.constant 0 : index
    %c0_16 = arith.constant 0 : index
    %27 = vector.load %arg7[%c0_15, %c0_16] : memref<256x128xbf16, #tpu.memory_space<vmem>>, vector<256x128xbf16>
    %cst_17 = arith.constant dense<0.000000e+00> : vector<16x128xf32>
    %28 = tpu.matmul %26, %27, %cst_17 {dimension_numbers = #tpu.dot_dimension_numbers<[1], [0], [0], [1], [0, 0, 1, 1], [], []>} : vector<16x256xbf16>, vector<256x128xbf16>, vector<16x128xf32> -> vector<16x128xf32>
    %c0_18 = arith.constant 0 : index
    %c0_19 = arith.constant 0 : index
    %29 = vector.load %arg8[%c0_18, %c0_19] : memref<1x128xf32, #tpu.memory_space<vmem>>, vector<1x128xf32>
    %30 = vector.broadcast %29 : vector<1x128xf32> to vector<16x128xf32>
    %31 = arith.addf %28, %30 : vector<16x128xf32>
    %32 = arith.truncf %31 : vector<16x128xf32> to vector<16x128xbf16>
    %c0_20 = arith.constant 0 : index
    %c0_21 = arith.constant 0 : index
    %33 = vector.load %arg9[%c0_20, %c0_21] : memref<16x128xbf16, #tpu.memory_space<vmem>>, vector<16x128xbf16>
    tpu.vector_store %arg9[%c0_20, %c0_21], %32 {strides = array<i32>} : memref<16x128xbf16, #tpu.memory_space<vmem>>, vector<16x128xbf16>,
    return
  }
  func.func @transform_0(%arg0: i32, %arg1: memref<2xf32, #tpu.memory_space<smem>>) -> (i32, i32) {
    %c0_i32 = arith.constant 0 : i32
    %c0_i32_0 = arith.constant 0 : i32
    return %arg0, %c0_i32 : i32, i32
  }
  func.func @transform_1(%arg0: i32, %arg1: memref<2xf32, #tpu.memory_space<smem>>) -> (i32, i32) {
    %c0_i32 = arith.constant 0 : i32
    %c0_i32_0 = arith.constant 0 : i32
    %c0_i32_1 = arith.constant 0 : i32
    return %c0_i32, %c0_i32_0 : i32, i32
  }
  func.func @transform_2(%arg0: i32, %arg1: memref<2xf32, #tpu.memory_space<smem>>) -> (i32, i32) {
    %c0_i32 = arith.constant 0 : i32
    %c0_i32_0 = arith.constant 0 : i32
    %c0_i32_1 = arith.constant 0 : i32
    return %c0_i32, %c0_i32_0 : i32, i32
  }
  func.func @transform_3(%arg0: i32, %arg1: memref<2xf32, #tpu.memory_space<smem>>) -> (i32, i32) {
    %c0_i32 = arith.constant 0 : i32
    %c0_i32_0 = arith.constant 0 : i32
    %c0_i32_1 = arith.constant 0 : i32
    return %c0_i32, %c0_i32_0 : i32, i32
  }
  func.func @transform_4(%arg0: i32, %arg1: memref<2xf32, #tpu.memory_space<smem>>) -> (i32, i32) {
    %c0_i32 = arith.constant 0 : i32
    %c0_i32_0 = arith.constant 0 : i32
    %c0_i32_1 = arith.constant 0 : i32
    return %c0_i32, %c0_i32_0 : i32, i32
  }
  func.func @transform_5(%arg0: i32, %arg1: memref<2xf32, #tpu.memory_space<smem>>) -> (i32, i32) {
    %c0_i32 = arith.constant 0 : i32
    %c0_i32_0 = arith.constant 0 : i32
    %c0_i32_1 = arith.constant 0 : i32
    return %c0_i32, %c0_i32_0 : i32, i32
  }
  func.func @transform_6(%arg0: i32, %arg1: memref<2xf32, #tpu.memory_space<smem>>) -> (i32, i32) {
    %c0_i32 = arith.constant 0 : i32
    %c0_i32_0 = arith.constant 0 : i32
    %c0_i32_1 = arith.constant 0 : i32
    return %c0_i32, %c0_i32_0 : i32, i32
  }
  func.func @transform_7(%arg0: i32, %arg1: memref<2xf32, #tpu.memory_space<smem>>) -> (i32, i32) {
    %c0_i32 = arith.constant 0 : i32
    %c0_i32_0 = arith.constant 0 : i32
    return %arg0, %c0_i32 : i32, i32
  }
}

module attributes {stable_mosaic.version = 11 : i64} {
  func.func @mlp_kernel(%arg0: i32, %arg1: memref<2xf32, #tpu.memory_space<smem>>, %arg2: memref<16x128xbf16, #tpu.memory_space<vmem>>, %arg3: memref<128x256xbf16, #tpu.memory_space<vmem>>, %arg4: memref<1x256xf32, #tpu.memory_space<vmem>>, %arg5: memref<256x256xbf16, #tpu.memory_space<vmem>>, %arg6: memref<1x256xf32, #tpu.memory_space<vmem>>, %arg7: memref<256x128xbf16, #tpu.memory_space<vmem>>, %arg8: memref<1x128xf32, #tpu.memory_space<vmem>>, %arg9: memref<16x128xbf16, #tpu.memory_space<vmem>>) attributes {dimension_semantics = [#tpu.dimension_semantics<parallel>], iteration_bounds = array<i64: 1>, scalar_prefetch = 1 : i64, scratch_operands = 0 : i64, tpu.core_type = #tpu.core_type<tc>, window_params = [{transform_indices = @transform_0, window_bounds = array<i64: 16, 128>}, {pipeline_mode = #tpu.pipeline_mode<synchronous>, transform_indices = @transform_1, window_bounds = array<i64: 128, 256>}, {pipeline_mode = #tpu.pipeline_mode<synchronous>, transform_indices = @transform_2, window_bounds = array<i64: 1, 256>}, {pipeline_mode = #tpu.pipeline_mode<synchronous>, transform_indices = @transform_3, window_bounds = array<i64: 256, 256>}, {pipeline_mode = #tpu.pipeline_mode<synchronous>, transform_indices = @transform_4, window_bounds = array<i64: 1, 256>}, {pipeline_mode = #tpu.pipeline_mode<synchronous>, transform_indices = @transform_5, window_bounds = array<i64: 256, 128>}, {pipeline_mode = #tpu.pipeline_mode<synchronous>, transform_indices = @transform_6, window_bounds = array<i64: 1, 128>}, {transform_indices = @transform_7, window_bounds = array<i64: 16, 128>}]} {
    %c0 = arith.constant 0 : index
    %0 = memref.load %arg1[%c0] : memref<2xf32, #tpu.memory_space<smem>>
    %c1 = arith.constant 1 : index
    %1 = memref.load %arg1[%c1] : memref<2xf32, #tpu.memory_space<smem>>
    %c0_0 = arith.constant 0 : index
    %c0_1 = arith.constant 0 : index
    %2 = vector.load %arg2[%c0_0, %c0_1] : memref<16x128xbf16, #tpu.memory_space<vmem>>, vector<16x128xbf16>
    %c0_2 = arith.constant 0 : index
    %c0_3 = arith.constant 0 : index
    %3 = vector.load %arg3[%c0_2, %c0_3] : memref<128x256xbf16, #tpu.memory_space<vmem>>, vector<128x256xbf16>
    %cst = arith.constant dense<0.000000e+00> : vector<16x256xf32>
    %4 = tpu.matmul %2, %3, %cst {dimension_numbers = #tpu.dot_dimension_numbers<[1], [0], [0], [1], [0, 0, 1, 1], [], []>} : vector<16x128xbf16>, vector<128x256xbf16>, vector<16x256xf32> -> vector<16x256xf32>
    %c0_4 = arith.constant 0 : index
    %c0_5 = arith.constant 0 : index
    %5 = vector.load %arg4[%c0_4, %c0_5] : memref<1x256xf32, #tpu.memory_space<vmem>>, vector<1x256xf32>
    %6 = vector.broadcast %5 : vector<1x256xf32> to vector<16x256xf32>
    %7 = arith.addf %4, %6 : vector<16x256xf32>
    %cst_6 = arith.constant 0.000000e+00 : f32
    %8 = vector.broadcast %cst_6 : f32 to vector<16x256xf32>
    %9 = arith.cmpf ogt, %7, %8 : vector<16x256xf32>
    %cst_7 = arith.constant 1.000000e+00 : f32
    %10 = vector.broadcast %cst_7 : f32 to vector<16x256xf32>
    %11 = vector.broadcast %0 : f32 to vector<16x256xf32>
    %12 = arith.select %9, %10, %11 : vector<16x256xi1>, vector<16x256xf32>
    %13 = arith.mulf %7, %12 : vector<16x256xf32>
    %14 = arith.truncf %13 : vector<16x256xf32> to vector<16x256xbf16>
    %c0_8 = arith.constant 0 : index
    %c0_9 = arith.constant 0 : index
    %15 = vector.load %arg5[%c0_8, %c0_9] : memref<256x256xbf16, #tpu.memory_space<vmem>>, vector<256x256xbf16>
    %cst_10 = arith.constant dense<0.000000e+00> : vector<16x256xf32>
    %16 = tpu.matmul %14, %15, %cst_10 {dimension_numbers = #tpu.dot_dimension_numbers<[1], [0], [0], [1], [0, 0, 1, 1], [], []>} : vector<16x256xbf16>, vector<256x256xbf16>, vector<16x256xf32> -> vector<16x256xf32>
    %c0_11 = arith.constant 0 : index
    %c0_12 = arith.constant 0 : index
    %17 = vector.load %arg6[%c0_11, %c0_12] : memref<1x256xf32, #tpu.memory_space<vmem>>, vector<1x256xf32>
    %18 = vector.broadcast %17 : vector<1x256xf32> to vector<16x256xf32>
    %19 = arith.addf %16, %18 : vector<16x256xf32>
    %cst_13 = arith.constant 0.000000e+00 : f32
    %20 = vector.broadcast %cst_13 : f32 to vector<16x256xf32>
    %21 = arith.cmpf ogt, %19, %20 : vector<16x256xf32>
    %cst_14 = arith.constant 1.000000e+00 : f32
    %22 = vector.broadcast %cst_14 : f32 to vector<16x256xf32>
    %23 = vector.broadcast %1 : f32 to vector<16x256xf32>
    %24 = arith.select %21, %22, %23 : vector<16x256xi1>, vector<16x256xf32>
    %25 = arith.mulf %19, %24 : vector<16x256xf32>
    %26 = arith.truncf %25 : vector<16x256xf32> to vector<16x256xbf16>
    %c0_15 = arith.constant 0 : index
    %c0_16 = arith.constant 0 : index
    %27 = vector.load %arg7[%c0_15, %c0_16] : memref<256x128xbf16, #tpu.memory_space<vmem>>, vector<256x128xbf16>
    %cst_17 = arith.constant dense<0.000000e+00> : vector<16x128xf32>
    %28 = tpu.matmul %26, %27, %cst_17 {dimension_numbers = #tpu.dot_dimension_numbers<[1], [0], [0], [1], [0, 0, 1, 1], [], []>} : vector<16x256xbf16>, vector<256x128xbf16>, vector<16x128xf32> -> vector<16x128xf32>
    %c0_18 = arith.constant 0 : index
    %c0_19 = arith.constant 0 : index
    %29 = vector.load %arg8[%c0_18, %c0_19] : memref<1x128xf32, #tpu.memory_space<vmem>>, vector<1x128xf32>
    %30 = vector.broadcast %29 : vector<1x128xf32> to vector<16x128xf32>
    %31 = arith.addf %28, %30 : vector<16x128xf32>
    %32 = arith.truncf %31 : vector<16x128xf32> to vector<16x128xbf16>
    %c0_20 = arith.constant 0 : index
    %c0_21 = arith.constant 0 : index
    %33 = vector.load %arg9[%c0_20, %c0_21] : memref<16x128xbf16, #tpu.memory_space<vmem>>, vector<16x128xbf16>
    tpu.vector_store %arg9[%c0_20, %c0_21], %32 {strides = array<i32>} : memref<16x128xbf16, #tpu.memory_space<vmem>>, vector<16x128xbf16>,
    return
  }
  func.func @transform_0(%arg0: i32, %arg1: memref<2xf32, #tpu.memory_space<smem>>) -> (i32, i32) {
    %c0_i32 = arith.constant 0 : i32
    %c0_i32_0 = arith.constant 0 : i32
    return %arg0, %c0_i32 : i32, i32
  }
  func.func @transform_1(%arg0: i32, %arg1: memref<2xf32, #tpu.memory_space<smem>>) -> (i32, i32) {
    %c0_i32 = arith.constant 0 : i32
    %c0_i32_0 = arith.constant 0 : i32
    %c0_i32_1 = arith.constant 0 : i32
    return %c0_i32, %c0_i32_0 : i32, i32
  }
  func.func @transform_2(%arg0: i32, %arg1: memref<2xf32, #tpu.memory_space<smem>>) -> (i32, i32) {
    %c0_i32 = arith.constant 0 : i32
    %c0_i32_0 = arith.constant 0 : i32
    %c0_i32_1 = arith.constant 0 : i32
    return %c0_i32, %c0_i32_0 : i32, i32
  }
  func.func @transform_3(%arg0: i32, %arg1: memref<2xf32, #tpu.memory_space<smem>>) -> (i32, i32) {
    %c0_i32 = arith.constant 0 : i32
    %c0_i32_0 = arith.constant 0 : i32
    %c0_i32_1 = arith.constant 0 : i32
    return %c0_i32, %c0_i32_0 : i32, i32
  }
  func.func @transform_4(%arg0: i32, %arg1: memref<2xf32, #tpu.memory_space<smem>>) -> (i32, i32) {
    %c0_i32 = arith.constant 0 : i32
    %c0_i32_0 = arith.constant 0 : i32
    %c0_i32_1 = arith.constant 0 : i32
    return %c0_i32, %c0_i32_0 : i32, i32
  }
  func.func @transform_5(%arg0: i32, %arg1: memref<2xf32, #tpu.memory_space<smem>>) -> (i32, i32) {
    %c0_i32 = arith.constant 0 : i32
    %c0_i32_0 = arith.constant 0 : i32
    %c0_i32_1 = arith.constant 0 : i32
    return %c0_i32, %c0_i32_0 : i32, i32
  }
  func.func @transform_6(%arg0: i32, %arg1: memref<2xf32, #tpu.memory_space<smem>>) -> (i32, i32) {
    %c0_i32 = arith.constant 0 : i32
    %c0_i32_0 = arith.constant 0 : i32
    %c0_i32_1 = arith.constant 0 : i32
    return %c0_i32, %c0_i32_0 : i32, i32
  }
  func.func @transform_7(%arg0: i32, %arg1: memref<2xf32, #tpu.memory_space<smem>>) -> (i32, i32) {
    %c0_i32 = arith.constant 0 : i32
    %c0_i32_0 = arith.constant 0 : i32
    return %arg0, %c0_i32 : i32, i32
  }
}

</mosaic_0001>

<llo_original>
// kernel: tpu_custom_call.1
$region0: #{tpu_custom_call.1}
  #allocation0 [shape = 'u32[]', space=smem, size = 0x4, offset = 0x4, fixed_abs, tag = 'smem constant byte address 0x4 - core index']
  #allocation1 [shape = 'u32[144,128]{1,0:T(1,128)}', space=vmem, size = 0x12000, scoped, tag = 'internal scratch']
  #allocation2 [shape = 's32[1]{0}', space=sflag, size = 0x4, scoped, tag = 'scoped memory for tpu_custom_call.1']
  #allocation3 [shape = 'u8[512]{0}', space=smem, size = 0x200, scoped, tag = 'prefetched SMEM operand 0']
  %s0 = inlined_call_operand.hbm [shape: f32[2], index: 0, kind: input, shape index: {}]
  %s1 = inlined_call_operand.hbm [shape: bf16[16,128], index: 1, kind: input, shape index: {}]
  %s2 = inlined_call_operand.hbm [shape: bf16[128,256], index: 2, kind: input, shape index: {}]
  %s3 = inlined_call_operand.vmem [shape: f32[1,256], index: 3, kind: input, shape index: {}]
  %s4 = inlined_call_operand.hbm [shape: bf16[256,256], index: 4, kind: input, shape index: {}]
  %s5 = inlined_call_operand.vmem [shape: f32[1,256], index: 5, kind: input, shape index: {}]
  %s6 = inlined_call_operand.hbm [shape: bf16[256,128], index: 6, kind: input, shape index: {}]
  %s7 = inlined_call_operand.vmem [shape: f32[1,128], index: 7, kind: input, shape index: {}]
  %s8 = inlined_call_operand.hbm [shape: bf16[16,128], index: 8, kind: output, shape index: {}]
  %s9 = sld [smem:[#allocation0]]
  $region54: #{tpu_custom_call.1} parent=0
    _
  %s11 = ssub.s32 1, %s9
  %s12 = scalar_select 0, %s11, %s9
  %14 = dma.hbm_to_smem %s0, 16, [#allocation3], [#allocation2]
  %15 = dma.done [#allocation2], 16
  %16 = sfence
  $region1: #{tpu_custom_call.1} parent=0
    #allocation4 [shape = 'u8[4096]{0}', space=vmem, size = 0x1000, scoped, tag = 'input window, operand 1, single buffered']
    #allocation5 [shape = 's32[1]{0}', space=sflag, size = 0x4, scoped, tag = 'scoped memory for tpu_custom_call.1']
    #allocation6 [shape = 's32[1]{0}', space=sflag, size = 0x4, scoped, tag = 'scoped memory for tpu_custom_call.1']
    #allocation7 [shape = 'u8[65536]{0}', space=vmem, size = 0x10000, scoped, tag = 'input window, operand 2, single buffered']
    #allocation8 [shape = 's32[1]{0}', space=sflag, size = 0x4, scoped, tag = 'scoped memory for tpu_custom_call.1']
    #allocation9 [shape = 'u8[131072]{0}', space=vmem, size = 0x20000, scoped, tag = 'input window, operand 4, single buffered']
    #allocation10 [shape = 'u8[65536]{0}', space=vmem, size = 0x10000, scoped, tag = 'input window, operand 6, single buffered']
    #allocation11 [shape = 's32[1]{0}', space=sflag, size = 0x4, scoped, tag = 'scoped memory for tpu_custom_call.1']
    #allocation12 [shape = 'u8[4096]{0}', space=vmem, size = 0x1000, scoped, tag = 'output window, operand 0, single buffered']
    %17 = vsyncpa [#allocation5], 0
    %18 = vsyncpa [#allocation8], 0
    %19 = vsyncpa [#allocation11], 0
    %20 = vsyncpa [#allocation6], 0
    // Predicated region
    $region2: #{tpu_custom_call.1} parent=1 // pred_check
      _
    $region3: #{tpu_custom_call.1} parent=1 // pred_check_branch
      %22 = sbr.rel (0) target = $region5
    $region4: #{tpu_custom_call.1} parent=1 // pred_region
      %s24 = ssub.s32 128, 128
      %25 = vsyncadd [#allocation5], %s24
      %s26 = sshll.u32 [#allocation4], 4
      %s27 = int_to_ptr.vmem [resolvable:$true] %s26
      %32 = dma.hbm_to_vmem [thread:$0]  %s1, 128, %s27, [#allocation5], 64, 64, 4
    $region5: #{tpu_custom_call.1} parent=1 // pred_fallthru
      _
    // Predicated region
    $region6: #{tpu_custom_call.1} parent=1 // pred_check
      _
    $region7: #{tpu_custom_call.1} parent=1 // pred_check_branch
      %34 = sbr.rel (0) target = $region9
    $region8: #{tpu_custom_call.1} parent=1 // pred_region
      %s36 = ssub.s32 2048, 2048
      %37 = vsyncadd [#allocation8], %s36
      %s38 = sshll.u32 [#allocation7], 4
      %s39 = int_to_ptr.vmem [resolvable:$true] %s38
      %44 = dma.hbm_to_vmem [thread:$0]  %s2, 2048, %s39, [#allocation8], 128, 128, 8
    $region9: #{tpu_custom_call.1} parent=1 // pred_fallthru
      _
    // Predicated region
    $region10: #{tpu_custom_call.1} parent=1 // pred_check
      _
    $region11: #{tpu_custom_call.1} parent=1 // pred_check_branch
      %46 = sbr.rel (0) target = $region13
    $region12: #{tpu_custom_call.1} parent=1 // pred_region
      _
    $region13: #{tpu_custom_call.1} parent=1 // pred_fallthru
      _
    // Predicated region
    $region14: #{tpu_custom_call.1} parent=1 // pred_check
      _
    $region15: #{tpu_custom_call.1} parent=1 // pred_check_branch
      %48 = sbr.rel (0) target = $region17
    $region16: #{tpu_custom_call.1} parent=1 // pred_region
      %s50 = ssub.s32 4096, 4096
      %51 = vsyncadd [#allocation8], %s50
      %s52 = sshll.u32 [#allocation9], 4
      %s53 = int_to_ptr.vmem [resolvable:$true] %s52
      %58 = dma.hbm_to_vmem [thread:$0]  %s4, 4096, %s53, [#allocation8], 128, 128, 8
    $region17: #{tpu_custom_call.1} parent=1 // pred_fallthru
      _
    // Predicated region
    $region18: #{tpu_custom_call.1} parent=1 // pred_check
      _
    $region19: #{tpu_custom_call.1} parent=1 // pred_check_branch
      %60 = sbr.rel (0) target = $region21
    $region20: #{tpu_custom_call.1} parent=1 // pred_region
      _
    $region21: #{tpu_custom_call.1} parent=1 // pred_fallthru
      _
    // Predicated region
    $region22: #{tpu_custom_call.1} parent=1 // pred_check
      _
    $region23: #{tpu_custom_call.1} parent=1 // pred_check_branch
      %62 = sbr.rel (0) target = $region25
    $region24: #{tpu_custom_call.1} parent=1 // pred_region
      %s64 = ssub.s32 2048, 2048
      %65 = vsyncadd [#allocation11], %s64
      %s66 = sshll.u32 [#allocation10], 4
      %s67 = int_to_ptr.vmem [resolvable:$true] %s66
      %72 = dma.hbm_to_vmem [thread:$0]  %s6, 2048, %s67, [#allocation11], 64, 64, 4
    $region25: #{tpu_custom_call.1} parent=1 // pred_fallthru
      _
    // Predicated region
    $region26: #{tpu_custom_call.1} parent=1 // pred_check
      _
    $region27: #{tpu_custom_call.1} parent=1 // pred_check_branch
      %74 = sbr.rel (0) target = $region29
    $region28: #{tpu_custom_call.1} parent=1 // pred_region
      _
    $region29: #{tpu_custom_call.1} parent=1 // pred_fallthru
      _
    // Predicated region
    $region30: #{tpu_custom_call.1} parent=1 // pred_check
      _
    $region31: #{tpu_custom_call.1} parent=1 // pred_check_branch
      %76 = sbr.rel (0) target = $region33
    $region32: #{tpu_custom_call.1} parent=1 // pred_region
      %77 = dma.done [#allocation5], 128
    $region33: #{tpu_custom_call.1} parent=1 // pred_fallthru
      _
    // Predicated region
    $region34: #{tpu_custom_call.1} parent=1 // pred_check
      _
    $region35: #{tpu_custom_call.1} parent=1 // pred_check_branch
      %79 = sbr.rel (0) target = $region37
    $region36: #{tpu_custom_call.1} parent=1 // pred_region
      %80 = dma.done [#allocation8], 2048
    $region37: #{tpu_custom_call.1} parent=1 // pred_fallthru
      _
    // Predicated region
    $region38: #{tpu_custom_call.1} parent=1 // pred_check
      _
    $region39: #{tpu_custom_call.1} parent=1 // pred_check_branch
      %82 = sbr.rel (0) target = $region41
    $region40: #{tpu_custom_call.1} parent=1 // pred_region
      %83 = dma.done [#allocation8], 4096
    $region41: #{tpu_custom_call.1} parent=1 // pred_fallthru
      _
    // Predicated region
    $region42: #{tpu_custom_call.1} parent=1 // pred_check
      _
    $region43: #{tpu_custom_call.1} parent=1 // pred_check_branch
      %85 = sbr.rel (0) target = $region45
    $region44: #{tpu_custom_call.1} parent=1 // pred_region
      %86 = dma.done [#allocation11], 2048
    $region45: #{tpu_custom_call.1} parent=1 // pred_fallthru
      _
    %s88 = sld [smem:[#allocation3]]
    %s89 = sld [smem:[#allocation3 + $0x1]]
    %v90 = vld [vmem:[#allocation4] sm:$0xf]
    %v91 = vld [vmem:[#allocation4 + $0x4] sm:$0xf]
    %v92 = vld [vmem:[#allocation7] sm:$0xff]
    %v93 = vld [vmem:[#allocation7 + $0x8] sm:$0xff]
    %v94 = vld [vmem:[#allocation7 + $0x10] sm:$0xff]
    %v95 = vld [vmem:[#allocation7 + $0x18] sm:$0xff]
    %v96 = vld [vmem:[#allocation7 + $0x20] sm:$0xff]
    %v97 = vld [vmem:[#allocation7 + $0x28] sm:$0xff]
    %v98 = vld [vmem:[#allocation7 + $0x30] sm:$0xff]
    %v99 = vld [vmem:[#allocation7 + $0x38] sm:$0xff]
    %v100 = vld [vmem:[#allocation7 + $0x40] sm:$0xff]
    %v101 = vld [vmem:[#allocation7 + $0x48] sm:$0xff]
    %v102 = vld [vmem:[#allocation7 + $0x50] sm:$0xff]
    %v103 = vld [vmem:[#allocation7 + $0x58] sm:$0xff]
    %v104 = vld [vmem:[#allocation7 + $0x60] sm:$0xff]
    %v105 = vld [vmem:[#allocation7 + $0x68] sm:$0xff]
    %v106 = vld [vmem:[#allocation7 + $0x70] sm:$0xff]
    %v107 = vld [vmem:[#allocation7 + $0x78] sm:$0xff]
    %v108 = vld [vmem:[%s3] sm:$0x3]
    %v110 = vlaneseq
    %v111 = vshrl.u32 %v110, 7
    %v112 = vsub.s32 0, %v111
    %v113 = vrot.slane %v108, %v112
    %v114 = vlaneseq
    %v115 = vshrl.u32 %v114, 7
    %v116 = vsub.s32 1, %v115
    %v117 = vrot.slane %v108, %v116
    %v122 = vunpack.c.l.b16 %v90
    %v123 = vunpack.c.l.b16 %v91
    %v124 = vpack.c.b16 %v123, %v122
    %v142 = vunpack.c.l.b16 %v92
    %v143 = vunpack.c.h.b16 %v92
    %v144 = vunpack.c.l.b16 %v93
    %v145 = vunpack.c.h.b16 %v93
    %v146 = vunpack.c.l.b16 %v94
    %v147 = vunpack.c.h.b16 %v94
    %v148 = vunpack.c.l.b16 %v95
    %v149 = vunpack.c.h.b16 %v95
    %v150 = vunpack.c.l.b16 %v96
    %v151 = vunpack.c.h.b16 %v96
    %v152 = vunpack.c.l.b16 %v97
    %v153 = vunpack.c.h.b16 %v97
    %v154 = vunpack.c.l.b16 %v98
    %v155 = vunpack.c.h.b16 %v98
    %v156 = vunpack.c.l.b16 %v99
    %v157 = vunpack.c.h.b16 %v99
    %v158 = vunpack.c.l.b16 %v100
    %v159 = vunpack.c.h.b16 %v100
    %v160 = vunpack.c.l.b16 %v101
    %v161 = vunpack.c.h.b16 %v101
    %v162 = vunpack.c.l.b16 %v102
    %v163 = vunpack.c.h.b16 %v102
    %v164 = vunpack.c.l.b16 %v103
    %v165 = vunpack.c.h.b16 %v103
    %v166 = vunpack.c.l.b16 %v104
    %v167 = vunpack.c.h.b16 %v104
    %v168 = vunpack.c.l.b16 %v105
    %v169 = vunpack.c.h.b16 %v105
    %v170 = vunpack.c.l.b16 %v106
    %v171 = vunpack.c.h.b16 %v106
    %v172 = vunpack.c.l.b16 %v107
    %v173 = vunpack.c.h.b16 %v107
    %v174 = vpack.c.b16 %v144, %v142
    %v175 = vpack.c.b16 %v145, %v143
    %v176 = vpack.c.b16 %v148, %v146
    %v177 = vpack.c.b16 %v149, %v147
    %v178 = vpack.c.b16 %v152, %v150
    %v179 = vpack.c.b16 %v153, %v151
    %v180 = vpack.c.b16 %v156, %v154
    %v181 = vpack.c.b16 %v157, %v155
    %v182 = vpack.c.b16 %v160, %v158
    %v183 = vpack.c.b16 %v161, %v159
    %v184 = vpack.c.b16 %v164, %v162
    %v185 = vpack.c.b16 %v165, %v163
    %v186 = vpack.c.b16 %v168, %v166
    %v187 = vpack.c.b16 %v169, %v167
    %v188 = vpack.c.b16 %v172, %v170
    %v189 = vpack.c.b16 %v173, %v171
    %206 = vmatprep.subr.bf16.mxu0 %v175
    %207 = vmatpush1.bf16.msra.mxu0 %v174
    %208 = vmatprep.subr.bf16.mxu0 %v177
    %209 = vmatpush1.bf16.msra.mxu0 %v176
    %210 = vmatprep.subr.bf16.mxu0 %v179
    %211 = vmatpush1.bf16.msra.mxu0 %v178
    %212 = vmatprep.subr.bf16.mxu0 %v181
    %213 = vmatpush1.bf16.msra.mxu0 %v180
    %214 = vmatprep.subr.bf16.mxu0 %v183
    %215 = vmatpush1.bf16.msra.mxu0 %v182
    %216 = vmatprep.subr.bf16.mxu0 %v185
    %217 = vmatpush1.bf16.msra.mxu0 %v184
    %218 = vmatprep.subr.bf16.mxu0 %v187
    %219 = vmatpush1.bf16.msra.mxu0 %v186
    %220 = vmatprep.subr.bf16.mxu0 %v189
    %221 = vmatpush1.bf16.msra.mxu0 %v188
    %222 = vmatprep.subr.bf16.mxu0 0
    %223 = vmatpush1.bf16.msra.mxu0 0
    %224 = vmatprep.subr.bf16.mxu0 0
    %225 = vmatpush1.bf16.msra.mxu0 0
    %226 = vmatprep.subr.bf16.mxu0 0
    %227 = vmatpush1.bf16.msra.mxu0 0
    %228 = vmatprep.subr.bf16.mxu0 0
    %229 = vmatpush1.bf16.msra.mxu0 0
    %230 = vmatprep.subr.bf16.mxu0 0
    %231 = vmatpush1.bf16.msra.mxu0 0
    %232 = vmatprep.subr.bf16.mxu0 0
    %233 = vmatpush1.bf16.msra.mxu0 0
    %234 = vmatprep.subr.bf16.mxu0 0
    %235 = vmatpush1.bf16.msra.mxu0 0
    %236 = vmatprep.subr.bf16.mxu0 0
    %237 = vmatpush1.bf16.msra.mxu0 0
    %238 = vmatprep.mubr.bf16.mxu0 0
    %239 = vmatmul.mubr.bf16.gmra.mrb[0].mxu0 %v124
    %v240 = vpop.f32.mrb[0].mxu0
    %v241 = vadd.f32 %v113, %v240
    %v242 = vpop.f32.mrb[0].mxu0
    %v243 = vadd.f32 %v117, %v242
    %v244 = vpop.f32.mrb[0].mxu0
    %v245 = vadd.f32 %v113, %v244
    %v246 = vpop.f32.mrb[0].mxu0
    %v247 = vadd.f32 %v117, %v246
    %248 = vdwg.mxu0
    %vm249 = vcmp.gt.f32.partialorder %v241, 0.0
    %vm250 = vcmp.gt.f32.partialorder %v243, 0.0
    %vm251 = vcmp.gt.f32.partialorder %v245, 0.0
    %vm252 = vcmp.gt.f32.partialorder %v247, 0.0
    %v253 = vstv %s88
    %v254 = vsel %vm249, 1.0, %v253
    %v255 = vsel %vm250, 1.0, %v253
    %v256 = vsel %vm251, 1.0, %v253
    %v257 = vsel %vm252, 1.0, %v253
    %v258 = vmul.f32 %v241, %v254
    %v259 = vmul.f32 %v243, %v255
    %v260 = vmul.f32 %v245, %v256
    %v261 = vmul.f32 %v247, %v257
    %v262 = vpack.c.bf16 %v260, %v258
    %v263 = vpack.c.bf16 %v261, %v259
    %v264 = vld [vmem:[#allocation9] sm:$0xff]
    %v265 = vld [vmem:[#allocation9 + $0x8] sm:$0xff]
    %v266 = vld [vmem:[#allocation9 + $0x10] sm:$0xff]
    %v267 = vld [vmem:[#allocation9 + $0x18] sm:$0xff]
    %v268 = vld [vmem:[#allocation9 + $0x20] sm:$0xff]
    %v269 = vld [vmem:[#allocation9 + $0x28] sm:$0xff]
    %v270 = vld [vmem:[#allocation9 + $0x30] sm:$0xff]
    %v271 = vld [vmem:[#allocation9 + $0x38] sm:$0xff]
    %v272 = vld [vmem:[#allocation9 + $0x40] sm:$0xff]
    %v273 = vld [vmem:[#allocation9 + $0x48] sm:$0xff]
    %v274 = vld [vmem:[#allocation9 + $0x50] sm:$0xff]
    %v275 = vld [vmem:[#allocation9 + $0x58] sm:$0xff]
    %v276 = vld [vmem:[#allocation9 + $0x60] sm:$0xff]
    %v277 = vld [vmem:[#allocation9 + $0x68] sm:$0xff]
    %v278 = vld [vmem:[#allocation9 + $0x70] sm:$0xff]
    %v279 = vld [vmem:[#allocation9 + $0x78] sm:$0xff]
    %v280 = vld [vmem:[#allocation9 + $0x80] sm:$0xff]
    %v281 = vld [vmem:[#allocation9 + $0x88] sm:$0xff]
    %v282 = vld [vmem:[#allocation9 + $0x90] sm:$0xff]
    %v283 = vld [vmem:[#allocation9 + $0x98] sm:$0xff]
    %v284 = vld [vmem:[#allocation9 + $0xa0] sm:$0xff]
    %v285 = vld [vmem:[#allocation9 + $0xa8] sm:$0xff]
    %v286 = vld [vmem:[#allocation9 + $0xb0] sm:$0xff]
    %v287 = vld [vmem:[#allocation9 + $0xb8] sm:$0xff]
    %v288 = vld [vmem:[#allocation9 + $0xc0] sm:$0xff]
    %v289 = vld [vmem:[#allocation9 + $0xc8] sm:$0xff]
    %v290 = vld [vmem:[#allocation9 + $0xd0] sm:$0xff]
    %v291 = vld [vmem:[#allocation9 + $0xd8] sm:$0xff]
    %v292 = vld [vmem:[#allocation9 + $0xe0] sm:$0xff]
    %v293 = vld [vmem:[#allocation9 + $0xe8] sm:$0xff]
    %v294 = vld [vmem:[#allocation9 + $0xf0] sm:$0xff]
    %v295 = vld [vmem:[#allocation9 + $0xf8] sm:$0xff]
    %v296 = vld [vmem:[%s5] sm:$0x3]
    %v298 = vlaneseq
    %v299 = vshrl.u32 %v298, 7
    %v300 = vsub.s32 0, %v299
    %v301 = vrot.slane %v296, %v300
    %v302 = vlaneseq
    %v303 = vshrl.u32 %v302, 7
    %v304 = vsub.s32 1, %v303
    %v305 = vrot.slane %v296, %v304
    %v340 = vunpack.c.l.b16 %v264
    %v341 = vunpack.c.h.b16 %v264
    %v342 = vunpack.c.l.b16 %v265
    %v343 = vunpack.c.h.b16 %v265
    %v344 = vunpack.c.l.b16 %v266
    %v345 = vunpack.c.h.b16 %v266
    %v346 = vunpack.c.l.b16 %v267
    %v347 = vunpack.c.h.b16 %v267
    %v348 = vunpack.c.l.b16 %v268
    %v349 = vunpack.c.h.b16 %v268
    %v350 = vunpack.c.l.b16 %v269
    %v351 = vunpack.c.h.b16 %v269
    %v352 = vunpack.c.l.b16 %v270
    %v353 = vunpack.c.h.b16 %v270
    %v354 = vunpack.c.l.b16 %v271
    %v355 = vunpack.c.h.b16 %v271
    %v356 = vunpack.c.l.b16 %v272
    %v357 = vunpack.c.h.b16 %v272
    %v358 = vunpack.c.l.b16 %v273
    %v359 = vunpack.c.h.b16 %v273
    %v360 = vunpack.c.l.b16 %v274
    %v361 = vunpack.c.h.b16 %v274
    %v362 = vunpack.c.l.b16 %v275
    %v363 = vunpack.c.h.b16 %v275
    %v364 = vunpack.c.l.b16 %v276
    %v365 = vunpack.c.h.b16 %v276
    %v366 = vunpack.c.l.b16 %v277
    %v367 = vunpack.c.h.b16 %v277
    %v368 = vunpack.c.l.b16 %v278
    %v369 = vunpack.c.h.b16 %v278
    %v370 = vunpack.c.l.b16 %v279
    %v371 = vunpack.c.h.b16 %v279
    %v372 = vunpack.c.l.b16 %v280
    %v373 = vunpack.c.h.b16 %v280
    %v374 = vunpack.c.l.b16 %v281
    %v375 = vunpack.c.h.b16 %v281
    %v376 = vunpack.c.l.b16 %v282
    %v377 = vunpack.c.h.b16 %v282
    %v378 = vunpack.c.l.b16 %v283
    %v379 = vunpack.c.h.b16 %v283
    %v380 = vunpack.c.l.b16 %v284
    %v381 = vunpack.c.h.b16 %v284
    %v382 = vunpack.c.l.b16 %v285
    %v383 = vunpack.c.h.b16 %v285
    %v384 = vunpack.c.l.b16 %v286
    %v385 = vunpack.c.h.b16 %v286
    %v386 = vunpack.c.l.b16 %v287
    %v387 = vunpack.c.h.b16 %v287
    %v388 = vunpack.c.l.b16 %v288
    %v389 = vunpack.c.h.b16 %v288
    %v390 = vunpack.c.l.b16 %v289
    %v391 = vunpack.c.h.b16 %v289
    %v392 = vunpack.c.l.b16 %v290
    %v393 = vunpack.c.h.b16 %v290
    %v394 = vunpack.c.l.b16 %v291
    %v395 = vunpack.c.h.b16 %v291
    %v396 = vunpack.c.l.b16 %v292
    %v397 = vunpack.c.h.b16 %v292
    %v398 = vunpack.c.l.b16 %v293
    %v399 = vunpack.c.h.b16 %v293
    %v400 = vunpack.c.l.b16 %v294
    %v401 = vunpack.c.h.b16 %v294
    %v402 = vunpack.c.l.b16 %v295
    %v403 = vunpack.c.h.b16 %v295
    %v404 = vpack.c.b16 %v342, %v340
    %v405 = vpack.c.b16 %v343, %v341
    %v406 = vpack.c.b16 %v346, %v344
    %v407 = vpack.c.b16 %v347, %v345
    %v408 = vpack.c.b16 %v350, %v348
    %v409 = vpack.c.b16 %v351, %v349
    %v410 = vpack.c.b16 %v354, %v352
    %v411 = vpack.c.b16 %v355, %v353
    %v412 = vpack.c.b16 %v358, %v356
    %v413 = vpack.c.b16 %v359, %v357
    %v414 = vpack.c.b16 %v362, %v360
    %v415 = vpack.c.b16 %v363, %v361
    %v416 = vpack.c.b16 %v366, %v364
    %v417 = vpack.c.b16 %v367, %v365
    %v418 = vpack.c.b16 %v370, %v368
    %v419 = vpack.c.b16 %v371, %v369
    %v420 = vpack.c.b16 %v374, %v372
    %v421 = vpack.c.b16 %v375, %v373
    %v422 = vpack.c.b16 %v378, %v376
    %v423 = vpack.c.b16 %v379, %v377
    %v424 = vpack.c.b16 %v382, %v380
    %v425 = vpack.c.b16 %v383, %v381
    %v426 = vpack.c.b16 %v386, %v384
    %v427 = vpack.c.b16 %v387, %v385
    %v428 = vpack.c.b16 %v390, %v388
    %v429 = vpack.c.b16 %v391, %v389
    %v430 = vpack.c.b16 %v394, %v392
    %v431 = vpack.c.b16 %v395, %v393
    %v432 = vpack.c.b16 %v398, %v396
    %v433 = vpack.c.b16 %v399, %v397
    %v434 = vpack.c.b16 %v402, %v400
    %v435 = vpack.c.b16 %v403, %v401
    %468 = vmatprep.subr.bf16.mxu0 %v405
    %469 = vmatpush1.bf16.msra.mxu0 %v404
    %470 = vmatprep.subr.bf16.mxu0 %v407
    %471 = vmatpush1.bf16.msra.mxu0 %v406
    %472 = vmatprep.subr.bf16.mxu0 %v409
    %473 = vmatpush1.bf16.msra.mxu0 %v408
    %474 = vmatprep.subr.bf16.mxu0 %v411
    %475 = vmatpush1.bf16.msra.mxu0 %v410
    %476 = vmatprep.subr.bf16.mxu0 %v413
    %477 = vmatpush1.bf16.msra.mxu0 %v412
    %478 = vmatprep.subr.bf16.mxu0 %v415
    %479 = vmatpush1.bf16.msra.mxu0 %v414
    %480 = vmatprep.subr.bf16.mxu0 %v417
    %481 = vmatpush1.bf16.msra.mxu0 %v416
    %482 = vmatprep.subr.bf16.mxu0 %v419
    %483 = vmatpush1.bf16.msra.mxu0 %v418
    %484 = vmatprep.subr.bf16.mxu0 %v421
    %485 = vmatpush1.bf16.msra.mxu0 %v420
    %486 = vmatprep.subr.bf16.mxu0 %v423
    %487 = vmatpush1.bf16.msra.mxu0 %v422
    %488 = vmatprep.subr.bf16.mxu0 %v425
    %489 = vmatpush1.bf16.msra.mxu0 %v424
    %490 = vmatprep.subr.bf16.mxu0 %v427
    %491 = vmatpush1.bf16.msra.mxu0 %v426
    %492 = vmatprep.subr.bf16.mxu0 %v429
    %493 = vmatpush1.bf16.msra.mxu0 %v428
    %494 = vmatprep.subr.bf16.mxu0 %v431
    %495 = vmatpush1.bf16.msra.mxu0 %v430
    %496 = vmatprep.subr.bf16.mxu0 %v433
    %497 = vmatpush1.bf16.msra.mxu0 %v432
    %498 = vmatprep.subr.bf16.mxu0 %v435
    %499 = vmatpush1.bf16.msra.mxu0 %v434
    %500 = vmatprep.mubr.bf16.mxu0 %v263
    %501 = vmatmul.mubr.bf16.gmra.mrb[0].mxu0 %v262
    %v502 = vpop.f32.mrb[0].mxu0
    %v503 = vadd.f32 %v301, %v502
    %v504 = vpop.f32.mrb[0].mxu0
    %v505 = vadd.f32 %v305, %v504
    %v506 = vpop.f32.mrb[0].mxu0
    %v507 = vadd.f32 %v301, %v506
    %v508 = vpop.f32.mrb[0].mxu0
    %v509 = vadd.f32 %v305, %v508
    %510 = vdwg.mxu0
    %vm511 = vcmp.gt.f32.partialorder %v503, 0.0
    %vm512 = vcmp.gt.f32.partialorder %v505, 0.0
    %vm513 = vcmp.gt.f32.partialorder %v507, 0.0
    %vm514 = vcmp.gt.f32.partialorder %v509, 0.0
    %v515 = vstv %s89
    %v516 = vsel %vm511, 1.0, %v515
    %v517 = vsel %vm512, 1.0, %v515
    %v518 = vsel %vm513, 1.0, %v515
    %v519 = vsel %vm514, 1.0, %v515
    %v520 = vmul.f32 %v503, %v516
    %v521 = vmul.f32 %v505, %v517
    %v522 = vmul.f32 %v507, %v518
    %v523 = vmul.f32 %v509, %v519
    %v524 = vpack.c.bf16 %v522, %v520
    %v525 = vpack.c.bf16 %v523, %v521
    %v526 = vld [vmem:[#allocation10] sm:$0xf]
    %v527 = vld [vmem:[#allocation10 + $0x4] sm:$0xf]
    %v528 = vld [vmem:[#allocation10 + $0x8] sm:$0xf]
    %v529 = vld [vmem:[#allocation10 + $0xc] sm:$0xf]
    %v530 = vld [vmem:[#allocation10 + $0x10] sm:$0xf]
    %v531 = vld [vmem:[#allocation10 + $0x14] sm:$0xf]
    %v532 = vld [vmem:[#allocation10 + $0x18] sm:$0xf]
    %v533 = vld [vmem:[#allocation10 + $0x1c] sm:$0xf]
    %v534 = vld [vmem:[#allocation10 + $0x20] sm:$0xf]
    %v535 = vld [vmem:[#allocation10 + $0x24] sm:$0xf]
    %v536 = vld [vmem:[#allocation10 + $0x28] sm:$0xf]
    %v537 = vld [vmem:[#allocation10 + $0x2c] sm:$0xf]
    %v538 = vld [vmem:[#allocation10 + $0x30] sm:$0xf]
    %v539 = vld [vmem:[#allocation10 + $0x34] sm:$0xf]
    %v540 = vld [vmem:[#allocation10 + $0x38] sm:$0xf]
    %v541 = vld [vmem:[#allocation10 + $0x3c] sm:$0xf]
    %v542 = vld [vmem:[#allocation10 + $0x40] sm:$0xf]
    %v543 = vld [vmem:[#allocation10 + $0x44] sm:$0xf]
    %v544 = vld [vmem:[#allocation10 + $0x48] sm:$0xf]
    %v545 = vld [vmem:[#allocation10 + $0x4c] sm:$0xf]
    %v546 = vld [vmem:[#allocation10 + $0x50] sm:$0xf]
    %v547 = vld [vmem:[#allocation10 + $0x54] sm:$0xf]
    %v548 = vld [vmem:[#allocation10 + $0x58] sm:$0xf]
    %v549 = vld [vmem:[#allocation10 + $0x5c] sm:$0xf]
    %v550 = vld [vmem:[#allocation10 + $0x60] sm:$0xf]
    %v551 = vld [vmem:[#allocation10 + $0x64] sm:$0xf]
    %v552 = vld [vmem:[#allocation10 + $0x68] sm:$0xf]
    %v553 = vld [vmem:[#allocation10 + $0x6c] sm:$0xf]
    %v554 = vld [vmem:[#allocation10 + $0x70] sm:$0xf]
    %v555 = vld [vmem:[#allocation10 + $0x74] sm:$0xf]
    %v556 = vld [vmem:[#allocation10 + $0x78] sm:$0xf]
    %v557 = vld [vmem:[#allocation10 + $0x7c] sm:$0xf]
    %v558 = vld [vmem:[%s7] sm:$0x1]
    %v560 = vlaneseq
    %v561 = vshrl.u32 %v560, 7
    %v562 = vsub.s32 0, %v561
    %v563 = vrot.slane %v558, %v562
    %v597 = vunpack.c.l.b16 %v526
    %v598 = vunpack.c.l.b16 %v527
    %v599 = vunpack.c.l.b16 %v528
    %v600 = vunpack.c.l.b16 %v529
    %v601 = vunpack.c.l.b16 %v530
    %v602 = vunpack.c.l.b16 %v531
    %v603 = vunpack.c.l.b16 %v532
    %v604 = vunpack.c.l.b16 %v533
    %v605 = vunpack.c.l.b16 %v534
    %v606 = vunpack.c.l.b16 %v535
    %v607 = vunpack.c.l.b16 %v536
    %v608 = vunpack.c.l.b16 %v537
    %v609 = vunpack.c.l.b16 %v538
    %v610 = vunpack.c.l.b16 %v539
    %v611 = vunpack.c.l.b16 %v540
    %v612 = vunpack.c.l.b16 %v541
    %v613 = vunpack.c.l.b16 %v542
    %v614 = vunpack.c.l.b16 %v543
    %v615 = vunpack.c.l.b16 %v544
    %v616 = vunpack.c.l.b16 %v545
    %v617 = vunpack.c.l.b16 %v546
    %v618 = vunpack.c.l.b16 %v547
    %v619 = vunpack.c.l.b16 %v548
    %v620 = vunpack.c.l.b16 %v549
    %v621 = vunpack.c.l.b16 %v550
    %v622 = vunpack.c.l.b16 %v551
    %v623 = vunpack.c.l.b16 %v552
    %v624 = vunpack.c.l.b16 %v553
    %v625 = vunpack.c.l.b16 %v554
    %v626 = vunpack.c.l.b16 %v555
    %v627 = vunpack.c.l.b16 %v556
    %v628 = vunpack.c.l.b16 %v557
    %v629 = vpack.c.b16 %v598, %v597
    %v630 = vpack.c.b16 %v600, %v599
    %v631 = vpack.c.b16 %v602, %v601
    %v632 = vpack.c.b16 %v604, %v603
    %v633 = vpack.c.b16 %v606, %v605
    %v634 = vpack.c.b16 %v608, %v607
    %v635 = vpack.c.b16 %v610, %v609
    %v636 = vpack.c.b16 %v612, %v611
    %v637 = vpack.c.b16 %v614, %v613
    %v638 = vpack.c.b16 %v616, %v615
    %v639 = vpack.c.b16 %v618, %v617
    %v640 = vpack.c.b16 %v620, %v619
    %v641 = vpack.c.b16 %v622, %v621
    %v642 = vpack.c.b16 %v624, %v623
    %v643 = vpack.c.b16 %v626, %v625
    %v644 = vpack.c.b16 %v628, %v627
    %661 = vmatprep.subr.bf16.mxu0 0
    %662 = vmatpush1.bf16.msra.mxu0 %v629
    %663 = vmatprep.subr.bf16.mxu0 0
    %664 = vmatpush1.bf16.msra.mxu0 %v630
    %665 = vmatprep.subr.bf16.mxu0 0
    %666 = vmatpush1.bf16.msra.mxu0 %v631
    %667 = vmatprep.subr.bf16.mxu0 0
    %668 = vmatpush1.bf16.msra.mxu0 %v632
    %669 = vmatprep.subr.bf16.mxu0 0
    %670 = vmatpush1.bf16.msra.mxu0 %v633
    %671 = vmatprep.subr.bf16.mxu0 0
    %672 = vmatpush1.bf16.msra.mxu0 %v634
    %673 = vmatprep.subr.bf16.mxu0 0
    %674 = vmatpush1.bf16.msra.mxu0 %v635
    %675 = vmatprep.subr.bf16.mxu0 0
    %676 = vmatpush1.bf16.msra.mxu0 %v636
    %677 = vmatprep.subr.bf16.mxu0 0
    %678 = vmatpush1.bf16.msra.mxu0 %v637
    %679 = vmatprep.subr.bf16.mxu0 0
    %680 = vmatpush1.bf16.msra.mxu0 %v638
    %681 = vmatprep.subr.bf16.mxu0 0
    %682 = vmatpush1.bf16.msra.mxu0 %v639
    %683 = vmatprep.subr.bf16.mxu0 0
    %684 = vmatpush1.bf16.msra.mxu0 %v640
    %685 = vmatprep.subr.bf16.mxu0 0
    %686 = vmatpush1.bf16.msra.mxu0 %v641
    %687 = vmatprep.subr.bf16.mxu0 0
    %688 = vmatpush1.bf16.msra.mxu0 %v642
    %689 = vmatprep.subr.bf16.mxu0 0
    %690 = vmatpush1.bf16.msra.mxu0 %v643
    %691 = vmatprep.subr.bf16.mxu0 0
    %692 = vmatpush1.bf16.msra.mxu0 %v644
    %693 = vmatprep.mubr.bf16.mxu0 %v525
    %694 = vmatmul.mubr.bf16.gmra.mrb[0].mxu0 %v524
    %v695 = vpop.f32.mrb[0].mxu0
    %v696 = vadd.f32 %v563, %v695
    %v697 = vpop.f32.mrb[0].mxu0
    %v698 = vpop.f32.mrb[0].mxu0
    %v699 = vadd.f32 %v563, %v698
    %v700 = vpop.f32.mrb[0].mxu0
    %701 = vdwg.mxu0
    %v702 = vpack.c.bf16 %v699, %v696
    %v704 = vunpack.c.l.b16 %v702
    %v705 = vunpack.c.h.b16 %v702
    %v706 = vpack.c.b16 %v704, %v704
    %v707 = vpack.c.b16 %v705, %v705
    %710 = vst [vmem:[#allocation12] sm:$0xf] %v706
    %711 = vst [vmem:[#allocation12 + $0x4] sm:$0xf] %v707
    // Predicated region
    $region46: #{tpu_custom_call.1} parent=1 // pred_check
      _
    $region47: #{tpu_custom_call.1} parent=1 // pred_check_branch
      %713 = sbr.rel (0) target = $region49
    $region48: #{tpu_custom_call.1} parent=1 // pred_region
      %s715 = ssub.s32 128, 128
      %716 = vsyncadd [#allocation6], %s715
      %s717 = sshll.u32 [#allocation12], 4
      %s718 = int_to_ptr.vmem [resolvable:$true] %s717
      %723 = dma.vmem_to_hbm [thread:$0]  %s718, 128, %s8, [#allocation6], 64, 64, 4
    $region49: #{tpu_custom_call.1} parent=1 // pred_fallthru
      _
    // Predicated region
    $region50: #{tpu_custom_call.1} parent=1 // pred_check
      _
    $region51: #{tpu_custom_call.1} parent=1 // pred_check_branch
      %725 = sbr.rel (0) target = $region53
    $region52: #{tpu_custom_call.1} parent=1 // pred_region
      %726 = dma.done [#allocation6], 128
    $region53: #{tpu_custom_call.1} parent=1 // pred_fallthru
      _
    %727 = vsyncpa [#allocation5], 1
    %728 = vsyncpa [#allocation8], 1
    %729 = vsyncpa [#allocation11], 1
    %730 = vsyncpa [#allocation6], 1

// kernel: tpu_custom_call.1
$region0: #{tpu_custom_call.1}
  #allocation0 [shape = 'u32[]', space=smem, size = 0x4, offset = 0x4, fixed_abs, tag = 'smem constant byte address 0x4 - core index']
  #allocation1 [shape = 'u32[144,128]{1,0:T(1,128)}', space=vmem, size = 0x12000, scoped, tag = 'internal scratch']
  #allocation2 [shape = 's32[1]{0}', space=sflag, size = 0x4, scoped, tag = 'scoped memory for tpu_custom_call.1']
  #allocation3 [shape = 'u8[512]{0}', space=smem, size = 0x200, scoped, tag = 'prefetched SMEM operand 0']
  %s0 = inlined_call_operand.hbm [shape: f32[2], index: 0, kind: input, shape index: {}]
  %s1 = inlined_call_operand.hbm [shape: bf16[16,128], index: 1, kind: input, shape index: {}]
  %s2 = inlined_call_operand.hbm [shape: bf16[128,256], index: 2, kind: input, shape index: {}]
  %s3 = inlined_call_operand.vmem [shape: f32[1,256], index: 3, kind: input, shape index: {}]
  %s4 = inlined_call_operand.hbm [shape: bf16[256,256], index: 4, kind: input, shape index: {}]
  %s5 = inlined_call_operand.vmem [shape: f32[1,256], index: 5, kind: input, shape index: {}]
  %s6 = inlined_call_operand.hbm [shape: bf16[256,128], index: 6, kind: input, shape index: {}]
  %s7 = inlined_call_operand.vmem [shape: f32[1,128], index: 7, kind: input, shape index: {}]
  %s8 = inlined_call_operand.hbm [shape: bf16[16,128], index: 8, kind: output, shape index: {}]
  %s9 = sld [smem:[#allocation0]]
  $region54: #{tpu_custom_call.1} parent=0
    _
  %s11 = ssub.s32 1, %s9
  %s12 = scalar_select 0, %s11, %s9
  %14 = dma.hbm_to_smem %s0, 16, [#allocation3], [#allocation2]
  %15 = dma.done [#allocation2], 16
  %16 = sfence
  $region1: #{tpu_custom_call.1} parent=0
    #allocation4 [shape = 'u8[4096]{0}', space=vmem, size = 0x1000, scoped, tag = 'input window, operand 1, single buffered']
    #allocation5 [shape = 's32[1]{0}', space=sflag, size = 0x4, scoped, tag = 'scoped memory for tpu_custom_call.1']
    #allocation6 [shape = 's32[1]{0}', space=sflag, size = 0x4, scoped, tag = 'scoped memory for tpu_custom_call.1']
    #allocation7 [shape = 'u8[65536]{0}', space=vmem, size = 0x10000, scoped, tag = 'input window, operand 2, single buffered']
    #allocation8 [shape = 's32[1]{0}', space=sflag, size = 0x4, scoped, tag = 'scoped memory for tpu_custom_call.1']
    #allocation9 [shape = 'u8[131072]{0}', space=vmem, size = 0x20000, scoped, tag = 'input window, operand 4, single buffered']
    #allocation10 [shape = 'u8[65536]{0}', space=vmem, size = 0x10000, scoped, tag = 'input window, operand 6, single buffered']
    #allocation11 [shape = 's32[1]{0}', space=sflag, size = 0x4, scoped, tag = 'scoped memory for tpu_custom_call.1']
    #allocation12 [shape = 'u8[4096]{0}', space=vmem, size = 0x1000, scoped, tag = 'output window, operand 0, single buffered']
    %17 = vsyncpa [#allocation5], 0
    %18 = vsyncpa [#allocation8], 0
    %19 = vsyncpa [#allocation11], 0
    %20 = vsyncpa [#allocation6], 0
    // Predicated region
    $region2: #{tpu_custom_call.1} parent=1 // pred_check
      _
    $region3: #{tpu_custom_call.1} parent=1 // pred_check_branch
      %22 = sbr.rel (0) target = $region5
    $region4: #{tpu_custom_call.1} parent=1 // pred_region
      %s24 = ssub.s32 128, 128
      %25 = vsyncadd [#allocation5], %s24
      %s26 = sshll.u32 [#allocation4], 4
      %s27 = int_to_ptr.vmem [resolvable:$true] %s26
      %32 = dma.hbm_to_vmem [thread:$0]  %s1, 128, %s27, [#allocation5], 64, 64, 4
    $region5: #{tpu_custom_call.1} parent=1 // pred_fallthru
      _
    // Predicated region
    $region6: #{tpu_custom_call.1} parent=1 // pred_check
      _
    $region7: #{tpu_custom_call.1} parent=1 // pred_check_branch
      %34 = sbr.rel (0) target = $region9
    $region8: #{tpu_custom_call.1} parent=1 // pred_region
      %s36 = ssub.s32 2048, 2048
      %37 = vsyncadd [#allocation8], %s36
      %s38 = sshll.u32 [#allocation7], 4
      %s39 = int_to_ptr.vmem [resolvable:$true] %s38
      %44 = dma.hbm_to_vmem [thread:$0]  %s2, 2048, %s39, [#allocation8], 128, 128, 8
    $region9: #{tpu_custom_call.1} parent=1 // pred_fallthru
      _
    // Predicated region
    $region10: #{tpu_custom_call.1} parent=1 // pred_check
      _
    $region11: #{tpu_custom_call.1} parent=1 // pred_check_branch
      %46 = sbr.rel (0) target = $region13
    $region12: #{tpu_custom_call.1} parent=1 // pred_region
      _
    $region13: #{tpu_custom_call.1} parent=1 // pred_fallthru
      _
    // Predicated region
    $region14: #{tpu_custom_call.1} parent=1 // pred_check
      _
    $region15: #{tpu_custom_call.1} parent=1 // pred_check_branch
      %48 = sbr.rel (0) target = $region17
    $region16: #{tpu_custom_call.1} parent=1 // pred_region
      %s50 = ssub.s32 4096, 4096
      %51 = vsyncadd [#allocation8], %s50
      %s52 = sshll.u32 [#allocation9], 4
      %s53 = int_to_ptr.vmem [resolvable:$true] %s52
      %58 = dma.hbm_to_vmem [thread:$0]  %s4, 4096, %s53, [#allocation8], 128, 128, 8
    $region17: #{tpu_custom_call.1} parent=1 // pred_fallthru
      _
    // Predicated region
    $region18: #{tpu_custom_call.1} parent=1 // pred_check
      _
    $region19: #{tpu_custom_call.1} parent=1 // pred_check_branch
      %60 = sbr.rel (0) target = $region21
    $region20: #{tpu_custom_call.1} parent=1 // pred_region
      _
    $region21: #{tpu_custom_call.1} parent=1 // pred_fallthru
      _
    // Predicated region
    $region22: #{tpu_custom_call.1} parent=1 // pred_check
      _
    $region23: #{tpu_custom_call.1} parent=1 // pred_check_branch
      %62 = sbr.rel (0) target = $region25
    $region24: #{tpu_custom_call.1} parent=1 // pred_region
      %s64 = ssub.s32 2048, 2048
      %65 = vsyncadd [#allocation11], %s64
      %s66 = sshll.u32 [#allocation10], 4
      %s67 = int_to_ptr.vmem [resolvable:$true] %s66
      %72 = dma.hbm_to_vmem [thread:$0]  %s6, 2048, %s67, [#allocation11], 64, 64, 4
    $region25: #{tpu_custom_call.1} parent=1 // pred_fallthru
      _
    // Predicated region
    $region26: #{tpu_custom_call.1} parent=1 // pred_check
      _
    $region27: #{tpu_custom_call.1} parent=1 // pred_check_branch
      %74 = sbr.rel (0) target = $region29
    $region28: #{tpu_custom_call.1} parent=1 // pred_region
      _
    $region29: #{tpu_custom_call.1} parent=1 // pred_fallthru
      _
    // Predicated region
    $region30: #{tpu_custom_call.1} parent=1 // pred_check
      _
    $region31: #{tpu_custom_call.1} parent=1 // pred_check_branch
      %76 = sbr.rel (0) target = $region33
    $region32: #{tpu_custom_call.1} parent=1 // pred_region
      %77 = dma.done [#allocation5], 128
    $region33: #{tpu_custom_call.1} parent=1 // pred_fallthru
      _
    // Predicated region
    $region34: #{tpu_custom_call.1} parent=1 // pred_check
      _
    $region35: #{tpu_custom_call.1} parent=1 // pred_check_branch
      %79 = sbr.rel (0) target = $region37
    $region36: #{tpu_custom_call.1} parent=1 // pred_region
      %80 = dma.done [#allocation8], 2048
    $region37: #{tpu_custom_call.1} parent=1 // pred_fallthru
      _
    // Predicated region
    $region38: #{tpu_custom_call.1} parent=1 // pred_check
      _
    $region39: #{tpu_custom_call.1} parent=1 // pred_check_branch
      %82 = sbr.rel (0) target = $region41
    $region40: #{tpu_custom_call.1} parent=1 // pred_region
      %83 = dma.done [#allocation8], 4096
    $region41: #{tpu_custom_call.1} parent=1 // pred_fallthru
      _
    // Predicated region
    $region42: #{tpu_custom_call.1} parent=1 // pred_check
      _
    $region43: #{tpu_custom_call.1} parent=1 // pred_check_branch
      %85 = sbr.rel (0) target = $region45
    $region44: #{tpu_custom_call.1} parent=1 // pred_region
      %86 = dma.done [#allocation11], 2048
    $region45: #{tpu_custom_call.1} parent=1 // pred_fallthru
      _
    %s88 = sld [smem:[#allocation3]]
    %s89 = sld [smem:[#allocation3 + $0x1]]
    %v90 = vld [vmem:[#allocation4] sm:$0xf]
    %v91 = vld [vmem:[#allocation4 + $0x4] sm:$0xf]
    %v92 = vld [vmem:[#allocation7] sm:$0xff]
    %v93 = vld [vmem:[#allocation7 + $0x8] sm:$0xff]
    %v94 = vld [vmem:[#allocation7 + $0x10] sm:$0xff]
    %v95 = vld [vmem:[#allocation7 + $0x18] sm:$0xff]
    %v96 = vld [vmem:[#allocation7 + $0x20] sm:$0xff]
    %v97 = vld [vmem:[#allocation7 + $0x28] sm:$0xff]
    %v98 = vld [vmem:[#allocation7 + $0x30] sm:$0xff]
    %v99 = vld [vmem:[#allocation7 + $0x38] sm:$0xff]
    %v100 = vld [vmem:[#allocation7 + $0x40] sm:$0xff]
    %v101 = vld [vmem:[#allocation7 + $0x48] sm:$0xff]
    %v102 = vld [vmem:[#allocation7 + $0x50] sm:$0xff]
    %v103 = vld [vmem:[#allocation7 + $0x58] sm:$0xff]
    %v104 = vld [vmem:[#allocation7 + $0x60] sm:$0xff]
    %v105 = vld [vmem:[#allocation7 + $0x68] sm:$0xff]
    %v106 = vld [vmem:[#allocation7 + $0x70] sm:$0xff]
    %v107 = vld [vmem:[#allocation7 + $0x78] sm:$0xff]
    %v108 = vld [vmem:[%s3] sm:$0x3]
    %v110 = vlaneseq
    %v111 = vshrl.u32 %v110, 7
    %v112 = vsub.s32 0, %v111
    %v113 = vrot.slane %v108, %v112
    %v114 = vlaneseq
    %v115 = vshrl.u32 %v114, 7
    %v116 = vsub.s32 1, %v115
    %v117 = vrot.slane %v108, %v116
    %v122 = vunpack.c.l.b16 %v90
    %v123 = vunpack.c.l.b16 %v91
    %v124 = vpack.c.b16 %v123, %v122
    %v142 = vunpack.c.l.b16 %v92
    %v143 = vunpack.c.h.b16 %v92
    %v144 = vunpack.c.l.b16 %v93
    %v145 = vunpack.c.h.b16 %v93
    %v146 = vunpack.c.l.b16 %v94
    %v147 = vunpack.c.h.b16 %v94
    %v148 = vunpack.c.l.b16 %v95
    %v149 = vunpack.c.h.b16 %v95
    %v150 = vunpack.c.l.b16 %v96
    %v151 = vunpack.c.h.b16 %v96
    %v152 = vunpack.c.l.b16 %v97
    %v153 = vunpack.c.h.b16 %v97
    %v154 = vunpack.c.l.b16 %v98
    %v155 = vunpack.c.h.b16 %v98
    %v156 = vunpack.c.l.b16 %v99
    %v157 = vunpack.c.h.b16 %v99
    %v158 = vunpack.c.l.b16 %v100
    %v159 = vunpack.c.h.b16 %v100
    %v160 = vunpack.c.l.b16 %v101
    %v161 = vunpack.c.h.b16 %v101
    %v162 = vunpack.c.l.b16 %v102
    %v163 = vunpack.c.h.b16 %v102
    %v164 = vunpack.c.l.b16 %v103
    %v165 = vunpack.c.h.b16 %v103
    %v166 = vunpack.c.l.b16 %v104
    %v167 = vunpack.c.h.b16 %v104
    %v168 = vunpack.c.l.b16 %v105
    %v169 = vunpack.c.h.b16 %v105
    %v170 = vunpack.c.l.b16 %v106
    %v171 = vunpack.c.h.b16 %v106
    %v172 = vunpack.c.l.b16 %v107
    %v173 = vunpack.c.h.b16 %v107
    %v174 = vpack.c.b16 %v144, %v142
    %v175 = vpack.c.b16 %v145, %v143
    %v176 = vpack.c.b16 %v148, %v146
    %v177 = vpack.c.b16 %v149, %v147
    %v178 = vpack.c.b16 %v152, %v150
    %v179 = vpack.c.b16 %v153, %v151
    %v180 = vpack.c.b16 %v156, %v154
    %v181 = vpack.c.b16 %v157, %v155
    %v182 = vpack.c.b16 %v160, %v158
    %v183 = vpack.c.b16 %v161, %v159
    %v184 = vpack.c.b16 %v164, %v162
    %v185 = vpack.c.b16 %v165, %v163
    %v186 = vpack.c.b16 %v168, %v166
    %v187 = vpack.c.b16 %v169, %v167
    %v188 = vpack.c.b16 %v172, %v170
    %v189 = vpack.c.b16 %v173, %v171
    %206 = vmatprep.subr.bf16.mxu0 %v175
    %207 = vmatpush1.bf16.msra.mxu0 %v174
    %208 = vmatprep.subr.bf16.mxu0 %v177
    %209 = vmatpush1.bf16.msra.mxu0 %v176
    %210 = vmatprep.subr.bf16.mxu0 %v179
    %211 = vmatpush1.bf16.msra.mxu0 %v178
    %212 = vmatprep.subr.bf16.mxu0 %v181
    %213 = vmatpush1.bf16.msra.mxu0 %v180
    %214 = vmatprep.subr.bf16.mxu0 %v183
    %215 = vmatpush1.bf16.msra.mxu0 %v182
    %216 = vmatprep.subr.bf16.mxu0 %v185
    %217 = vmatpush1.bf16.msra.mxu0 %v184
    %218 = vmatprep.subr.bf16.mxu0 %v187
    %219 = vmatpush1.bf16.msra.mxu0 %v186
    %220 = vmatprep.subr.bf16.mxu0 %v189
    %221 = vmatpush1.bf16.msra.mxu0 %v188
    %222 = vmatprep.subr.bf16.mxu0 0
    %223 = vmatpush1.bf16.msra.mxu0 0
    %224 = vmatprep.subr.bf16.mxu0 0
    %225 = vmatpush1.bf16.msra.mxu0 0
    %226 = vmatprep.subr.bf16.mxu0 0
    %227 = vmatpush1.bf16.msra.mxu0 0
    %228 = vmatprep.subr.bf16.mxu0 0
    %229 = vmatpush1.bf16.msra.mxu0 0
    %230 = vmatprep.subr.bf16.mxu0 0
    %231 = vmatpush1.bf16.msra.mxu0 0
    %232 = vmatprep.subr.bf16.mxu0 0
    %233 = vmatpush1.bf16.msra.mxu0 0
    %234 = vmatprep.subr.bf16.mxu0 0
    %235 = vmatpush1.bf16.msra.mxu0 0
    %236 = vmatprep.subr.bf16.mxu0 0
    %237 = vmatpush1.bf16.msra.mxu0 0
    %238 = vmatprep.mubr.bf16.mxu0 0
    %239 = vmatmul.mubr.bf16.gmra.mrb[0].mxu0 %v124
    %v240 = vpop.f32.mrb[0].mxu0
    %v241 = vadd.f32 %v113, %v240
    %v242 = vpop.f32.mrb[0].mxu0
    %v243 = vadd.f32 %v117, %v242
    %v244 = vpop.f32.mrb[0].mxu0
    %v245 = vadd.f32 %v113, %v244
    %v246 = vpop.f32.mrb[0].mxu0
    %v247 = vadd.f32 %v117, %v246
    %248 = vdwg.mxu0
    %vm249 = vcmp.gt.f32.partialorder %v241, 0.0
    %vm250 = vcmp.gt.f32.partialorder %v243, 0.0
    %vm251 = vcmp.gt.f32.partialorder %v245, 0.0
    %vm252 = vcmp.gt.f32.partialorder %v247, 0.0
    %v253 = vstv %s88
    %v254 = vsel %vm249, 1.0, %v253
    %v255 = vsel %vm250, 1.0, %v253
    %v256 = vsel %vm251, 1.0, %v253
    %v257 = vsel %vm252, 1.0, %v253
    %v258 = vmul.f32 %v241, %v254
    %v259 = vmul.f32 %v243, %v255
    %v260 = vmul.f32 %v245, %v256
    %v261 = vmul.f32 %v247, %v257
    %v262 = vpack.c.bf16 %v260, %v258
    %v263 = vpack.c.bf16 %v261, %v259
    %v264 = vld [vmem:[#allocation9] sm:$0xff]
    %v265 = vld [vmem:[#allocation9 + $0x8] sm:$0xff]
    %v266 = vld [vmem:[#allocation9 + $0x10] sm:$0xff]
    %v267 = vld [vmem:[#allocation9 + $0x18] sm:$0xff]
    %v268 = vld [vmem:[#allocation9 + $0x20] sm:$0xff]
    %v269 = vld [vmem:[#allocation9 + $0x28] sm:$0xff]
    %v270 = vld [vmem:[#allocation9 + $0x30] sm:$0xff]
    %v271 = vld [vmem:[#allocation9 + $0x38] sm:$0xff]
    %v272 = vld [vmem:[#allocation9 + $0x40] sm:$0xff]
    %v273 = vld [vmem:[#allocation9 + $0x48] sm:$0xff]
    %v274 = vld [vmem:[#allocation9 + $0x50] sm:$0xff]
    %v275 = vld [vmem:[#allocation9 + $0x58] sm:$0xff]
    %v276 = vld [vmem:[#allocation9 + $0x60] sm:$0xff]
    %v277 = vld [vmem:[#allocation9 + $0x68] sm:$0xff]
    %v278 = vld [vmem:[#allocation9 + $0x70] sm:$0xff]
    %v279 = vld [vmem:[#allocation9 + $0x78] sm:$0xff]
    %v280 = vld [vmem:[#allocation9 + $0x80] sm:$0xff]
    %v281 = vld [vmem:[#allocation9 + $0x88] sm:$0xff]
    %v282 = vld [vmem:[#allocation9 + $0x90] sm:$0xff]
    %v283 = vld [vmem:[#allocation9 + $0x98] sm:$0xff]
    %v284 = vld [vmem:[#allocation9 + $0xa0] sm:$0xff]
    %v285 = vld [vmem:[#allocation9 + $0xa8] sm:$0xff]
    %v286 = vld [vmem:[#allocation9 + $0xb0] sm:$0xff]
    %v287 = vld [vmem:[#allocation9 + $0xb8] sm:$0xff]
    %v288 = vld [vmem:[#allocation9 + $0xc0] sm:$0xff]
    %v289 = vld [vmem:[#allocation9 + $0xc8] sm:$0xff]
    %v290 = vld [vmem:[#allocation9 + $0xd0] sm:$0xff]
    %v291 = vld [vmem:[#allocation9 + $0xd8] sm:$0xff]
    %v292 = vld [vmem:[#allocation9 + $0xe0] sm:$0xff]
    %v293 = vld [vmem:[#allocation9 + $0xe8] sm:$0xff]
    %v294 = vld [vmem:[#allocation9 + $0xf0] sm:$0xff]
    %v295 = vld [vmem:[#allocation9 + $0xf8] sm:$0xff]
    %v296 = vld [vmem:[%s5] sm:$0x3]
    %v298 = vlaneseq
    %v299 = vshrl.u32 %v298, 7
    %v300 = vsub.s32 0, %v299
    %v301 = vrot.slane %v296, %v300
    %v302 = vlaneseq
    %v303 = vshrl.u32 %v302, 7
    %v304 = vsub.s32 1, %v303
    %v305 = vrot.slane %v296, %v304
    %v340 = vunpack.c.l.b16 %v264
    %v341 = vunpack.c.h.b16 %v264
    %v342 = vunpack.c.l.b16 %v265
    %v343 = vunpack.c.h.b16 %v265
    %v344 = vunpack.c.l.b16 %v266
    %v345 = vunpack.c.h.b16 %v266
    %v346 = vunpack.c.l.b16 %v267
    %v347 = vunpack.c.h.b16 %v267
    %v348 = vunpack.c.l.b16 %v268
    %v349 = vunpack.c.h.b16 %v268
    %v350 = vunpack.c.l.b16 %v269
    %v351 = vunpack.c.h.b16 %v269
    %v352 = vunpack.c.l.b16 %v270
    %v353 = vunpack.c.h.b16 %v270
    %v354 = vunpack.c.l.b16 %v271
    %v355 = vunpack.c.h.b16 %v271
    %v356 = vunpack.c.l.b16 %v272
    %v357 = vunpack.c.h.b16 %v272
    %v358 = vunpack.c.l.b16 %v273
    %v359 = vunpack.c.h.b16 %v273
    %v360 = vunpack.c.l.b16 %v274
    %v361 = vunpack.c.h.b16 %v274
    %v362 = vunpack.c.l.b16 %v275
    %v363 = vunpack.c.h.b16 %v275
    %v364 = vunpack.c.l.b16 %v276
    %v365 = vunpack.c.h.b16 %v276
    %v366 = vunpack.c.l.b16 %v277
    %v367 = vunpack.c.h.b16 %v277
    %v368 = vunpack.c.l.b16 %v278
    %v369 = vunpack.c.h.b16 %v278
    %v370 = vunpack.c.l.b16 %v279
    %v371 = vunpack.c.h.b16 %v279
    %v372 = vunpack.c.l.b16 %v280
    %v373 = vunpack.c.h.b16 %v280
    %v374 = vunpack.c.l.b16 %v281
    %v375 = vunpack.c.h.b16 %v281
    %v376 = vunpack.c.l.b16 %v282
    %v377 = vunpack.c.h.b16 %v282
    %v378 = vunpack.c.l.b16 %v283
    %v379 = vunpack.c.h.b16 %v283
    %v380 = vunpack.c.l.b16 %v284
    %v381 = vunpack.c.h.b16 %v284
    %v382 = vunpack.c.l.b16 %v285
    %v383 = vunpack.c.h.b16 %v285
    %v384 = vunpack.c.l.b16 %v286
    %v385 = vunpack.c.h.b16 %v286
    %v386 = vunpack.c.l.b16 %v287
    %v387 = vunpack.c.h.b16 %v287
    %v388 = vunpack.c.l.b16 %v288
    %v389 = vunpack.c.h.b16 %v288
    %v390 = vunpack.c.l.b16 %v289
    %v391 = vunpack.c.h.b16 %v289
    %v392 = vunpack.c.l.b16 %v290
    %v393 = vunpack.c.h.b16 %v290
    %v394 = vunpack.c.l.b16 %v291
    %v395 = vunpack.c.h.b16 %v291
    %v396 = vunpack.c.l.b16 %v292
    %v397 = vunpack.c.h.b16 %v292
    %v398 = vunpack.c.l.b16 %v293
    %v399 = vunpack.c.h.b16 %v293
    %v400 = vunpack.c.l.b16 %v294
    %v401 = vunpack.c.h.b16 %v294
    %v402 = vunpack.c.l.b16 %v295
    %v403 = vunpack.c.h.b16 %v295
    %v404 = vpack.c.b16 %v342, %v340
    %v405 = vpack.c.b16 %v343, %v341
    %v406 = vpack.c.b16 %v346, %v344
    %v407 = vpack.c.b16 %v347, %v345
    %v408 = vpack.c.b16 %v350, %v348
    %v409 = vpack.c.b16 %v351, %v349
    %v410 = vpack.c.b16 %v354, %v352
    %v411 = vpack.c.b16 %v355, %v353
    %v412 = vpack.c.b16 %v358, %v356
    %v413 = vpack.c.b16 %v359, %v357
    %v414 = vpack.c.b16 %v362, %v360
    %v415 = vpack.c.b16 %v363, %v361
    %v416 = vpack.c.b16 %v366, %v364
    %v417 = vpack.c.b16 %v367, %v365
    %v418 = vpack.c.b16 %v370, %v368
    %v419 = vpack.c.b16 %v371, %v369
    %v420 = vpack.c.b16 %v374, %v372
    %v421 = vpack.c.b16 %v375, %v373
    %v422 = vpack.c.b16 %v378, %v376
    %v423 = vpack.c.b16 %v379, %v377
    %v424 = vpack.c.b16 %v382, %v380
    %v425 = vpack.c.b16 %v383, %v381
    %v426 = vpack.c.b16 %v386, %v384
    %v427 = vpack.c.b16 %v387, %v385
    %v428 = vpack.c.b16 %v390, %v388
    %v429 = vpack.c.b16 %v391, %v389
    %v430 = vpack.c.b16 %v394, %v392
    %v431 = vpack.c.b16 %v395, %v393
    %v432 = vpack.c.b16 %v398, %v396
    %v433 = vpack.c.b16 %v399, %v397
    %v434 = vpack.c.b16 %v402, %v400
    %v435 = vpack.c.b16 %v403, %v401
    %468 = vmatprep.subr.bf16.mxu0 %v405
    %469 = vmatpush1.bf16.msra.mxu0 %v404
    %470 = vmatprep.subr.bf16.mxu0 %v407
    %471 = vmatpush1.bf16.msra.mxu0 %v406
    %472 = vmatprep.subr.bf16.mxu0 %v409
    %473 = vmatpush1.bf16.msra.mxu0 %v408
    %474 = vmatprep.subr.bf16.mxu0 %v411
    %475 = vmatpush1.bf16.msra.mxu0 %v410
    %476 = vmatprep.subr.bf16.mxu0 %v413
    %477 = vmatpush1.bf16.msra.mxu0 %v412
    %478 = vmatprep.subr.bf16.mxu0 %v415
    %479 = vmatpush1.bf16.msra.mxu0 %v414
    %480 = vmatprep.subr.bf16.mxu0 %v417
    %481 = vmatpush1.bf16.msra.mxu0 %v416
    %482 = vmatprep.subr.bf16.mxu0 %v419
    %483 = vmatpush1.bf16.msra.mxu0 %v418
    %484 = vmatprep.subr.bf16.mxu0 %v421
    %485 = vmatpush1.bf16.msra.mxu0 %v420
    %486 = vmatprep.subr.bf16.mxu0 %v423
    %487 = vmatpush1.bf16.msra.mxu0 %v422
    %488 = vmatprep.subr.bf16.mxu0 %v425
    %489 = vmatpush1.bf16.msra.mxu0 %v424
    %490 = vmatprep.subr.bf16.mxu0 %v427
    %491 = vmatpush1.bf16.msra.mxu0 %v426
    %492 = vmatprep.subr.bf16.mxu0 %v429
    %493 = vmatpush1.bf16.msra.mxu0 %v428
    %494 = vmatprep.subr.bf16.mxu0 %v431
    %495 = vmatpush1.bf16.msra.mxu0 %v430
    %496 = vmatprep.subr.bf16.mxu0 %v433
    %497 = vmatpush1.bf16.msra.mxu0 %v432
    %498 = vmatprep.subr.bf16.mxu0 %v435
    %499 = vmatpush1.bf16.msra.mxu0 %v434
    %500 = vmatprep.mubr.bf16.mxu0 %v263
    %501 = vmatmul.mubr.bf16.gmra.mrb[0].mxu0 %v262
    %v502 = vpop.f32.mrb[0].mxu0
    %v503 = vadd.f32 %v301, %v502
    %v504 = vpop.f32.mrb[0].mxu0
    %v505 = vadd.f32 %v305, %v504
    %v506 = vpop.f32.mrb[0].mxu0
    %v507 = vadd.f32 %v301, %v506
    %v508 = vpop.f32.mrb[0].mxu0
    %v509 = vadd.f32 %v305, %v508
    %510 = vdwg.mxu0
    %vm511 = vcmp.gt.f32.partialorder %v503, 0.0
    %vm512 = vcmp.gt.f32.partialorder %v505, 0.0
    %vm513 = vcmp.gt.f32.partialorder %v507, 0.0
    %vm514 = vcmp.gt.f32.partialorder %v509, 0.0
    %v515 = vstv %s89
    %v516 = vsel %vm511, 1.0, %v515
    %v517 = vsel %vm512, 1.0, %v515
    %v518 = vsel %vm513, 1.0, %v515
    %v519 = vsel %vm514, 1.0, %v515
    %v520 = vmul.f32 %v503, %v516
    %v521 = vmul.f32 %v505, %v517
    %v522 = vmul.f32 %v507, %v518
    %v523 = vmul.f32 %v509, %v519
    %v524 = vpack.c.bf16 %v522, %v520
    %v525 = vpack.c.bf16 %v523, %v521
    %v526 = vld [vmem:[#allocation10] sm:$0xf]
    %v527 = vld [vmem:[#allocation10 + $0x4] sm:$0xf]
    %v528 = vld [vmem:[#allocation10 + $0x8] sm:$0xf]
    %v529 = vld [vmem:[#allocation10 + $0xc] sm:$0xf]
    %v530 = vld [vmem:[#allocation10 + $0x10] sm:$0xf]
    %v531 = vld [vmem:[#allocation10 + $0x14] sm:$0xf]
    %v532 = vld [vmem:[#allocation10 + $0x18] sm:$0xf]
    %v533 = vld [vmem:[#allocation10 + $0x1c] sm:$0xf]
    %v534 = vld [vmem:[#allocation10 + $0x20] sm:$0xf]
    %v535 = vld [vmem:[#allocation10 + $0x24] sm:$0xf]
    %v536 = vld [vmem:[#allocation10 + $0x28] sm:$0xf]
    %v537 = vld [vmem:[#allocation10 + $0x2c] sm:$0xf]
    %v538 = vld [vmem:[#allocation10 + $0x30] sm:$0xf]
    %v539 = vld [vmem:[#allocation10 + $0x34] sm:$0xf]
    %v540 = vld [vmem:[#allocation10 + $0x38] sm:$0xf]
    %v541 = vld [vmem:[#allocation10 + $0x3c] sm:$0xf]
    %v542 = vld [vmem:[#allocation10 + $0x40] sm:$0xf]
    %v543 = vld [vmem:[#allocation10 + $0x44] sm:$0xf]
    %v544 = vld [vmem:[#allocation10 + $0x48] sm:$0xf]
    %v545 = vld [vmem:[#allocation10 + $0x4c] sm:$0xf]
    %v546 = vld [vmem:[#allocation10 + $0x50] sm:$0xf]
    %v547 = vld [vmem:[#allocation10 + $0x54] sm:$0xf]
    %v548 = vld [vmem:[#allocation10 + $0x58] sm:$0xf]
    %v549 = vld [vmem:[#allocation10 + $0x5c] sm:$0xf]
    %v550 = vld [vmem:[#allocation10 + $0x60] sm:$0xf]
    %v551 = vld [vmem:[#allocation10 + $0x64] sm:$0xf]
    %v552 = vld [vmem:[#allocation10 + $0x68] sm:$0xf]
    %v553 = vld [vmem:[#allocation10 + $0x6c] sm:$0xf]
    %v554 = vld [vmem:[#allocation10 + $0x70] sm:$0xf]
    %v555 = vld [vmem:[#allocation10 + $0x74] sm:$0xf]
    %v556 = vld [vmem:[#allocation10 + $0x78] sm:$0xf]
    %v557 = vld [vmem:[#allocation10 + $0x7c] sm:$0xf]
    %v558 = vld [vmem:[%s7] sm:$0x1]
    %v560 = vlaneseq
    %v561 = vshrl.u32 %v560, 7
    %v562 = vsub.s32 0, %v561
    %v563 = vrot.slane %v558, %v562
    %v597 = vunpack.c.l.b16 %v526
    %v598 = vunpack.c.l.b16 %v527
    %v599 = vunpack.c.l.b16 %v528
    %v600 = vunpack.c.l.b16 %v529
    %v601 = vunpack.c.l.b16 %v530
    %v602 = vunpack.c.l.b16 %v531
    %v603 = vunpack.c.l.b16 %v532
    %v604 = vunpack.c.l.b16 %v533
    %v605 = vunpack.c.l.b16 %v534
    %v606 = vunpack.c.l.b16 %v535
    %v607 = vunpack.c.l.b16 %v536
    %v608 = vunpack.c.l.b16 %v537
    %v609 = vunpack.c.l.b16 %v538
    %v610 = vunpack.c.l.b16 %v539
    %v611 = vunpack.c.l.b16 %v540
    %v612 = vunpack.c.l.b16 %v541
    %v613 = vunpack.c.l.b16 %v542
    %v614 = vunpack.c.l.b16 %v543
    %v615 = vunpack.c.l.b16 %v544
    %v616 = vunpack.c.l.b16 %v545
    %v617 = vunpack.c.l.b16 %v546
    %v618 = vunpack.c.l.b16 %v547
    %v619 = vunpack.c.l.b16 %v548
    %v620 = vunpack.c.l.b16 %v549
    %v621 = vunpack.c.l.b16 %v550
    %v622 = vunpack.c.l.b16 %v551
    %v623 = vunpack.c.l.b16 %v552
    %v624 = vunpack.c.l.b16 %v553
    %v625 = vunpack.c.l.b16 %v554
    %v626 = vunpack.c.l.b16 %v555
    %v627 = vunpack.c.l.b16 %v556
    %v628 = vunpack.c.l.b16 %v557
    %v629 = vpack.c.b16 %v598, %v597
    %v630 = vpack.c.b16 %v600, %v599
    %v631 = vpack.c.b16 %v602, %v601
    %v632 = vpack.c.b16 %v604, %v603
    %v633 = vpack.c.b16 %v606, %v605
    %v634 = vpack.c.b16 %v608, %v607
    %v635 = vpack.c.b16 %v610, %v609
    %v636 = vpack.c.b16 %v612, %v611
    %v637 = vpack.c.b16 %v614, %v613
    %v638 = vpack.c.b16 %v616, %v615
    %v639 = vpack.c.b16 %v618, %v617
    %v640 = vpack.c.b16 %v620, %v619
    %v641 = vpack.c.b16 %v622, %v621
    %v642 = vpack.c.b16 %v624, %v623
    %v643 = vpack.c.b16 %v626, %v625
    %v644 = vpack.c.b16 %v628, %v627
    %661 = vmatprep.subr.bf16.mxu0 0
    %662 = vmatpush1.bf16.msra.mxu0 %v629
    %663 = vmatprep.subr.bf16.mxu0 0
    %664 = vmatpush1.bf16.msra.mxu0 %v630
    %665 = vmatprep.subr.bf16.mxu0 0
    %666 = vmatpush1.bf16.msra.mxu0 %v631
    %667 = vmatprep.subr.bf16.mxu0 0
    %668 = vmatpush1.bf16.msra.mxu0 %v632
    %669 = vmatprep.subr.bf16.mxu0 0
    %670 = vmatpush1.bf16.msra.mxu0 %v633
    %671 = vmatprep.subr.bf16.mxu0 0
    %672 = vmatpush1.bf16.msra.mxu0 %v634
    %673 = vmatprep.subr.bf16.mxu0 0
    %674 = vmatpush1.bf16.msra.mxu0 %v635
    %675 = vmatprep.subr.bf16.mxu0 0
    %676 = vmatpush1.bf16.msra.mxu0 %v636
    %677 = vmatprep.subr.bf16.mxu0 0
    %678 = vmatpush1.bf16.msra.mxu0 %v637
    %679 = vmatprep.subr.bf16.mxu0 0
    %680 = vmatpush1.bf16.msra.mxu0 %v638
    %681 = vmatprep.subr.bf16.mxu0 0
    %682 = vmatpush1.bf16.msra.mxu0 %v639
    %683 = vmatprep.subr.bf16.mxu0 0
    %684 = vmatpush1.bf16.msra.mxu0 %v640
    %685 = vmatprep.subr.bf16.mxu0 0
    %686 = vmatpush1.bf16.msra.mxu0 %v641
    %687 = vmatprep.subr.bf16.mxu0 0
    %688 = vmatpush1.bf16.msra.mxu0 %v642
    %689 = vmatprep.subr.bf16.mxu0 0
    %690 = vmatpush1.bf16.msra.mxu0 %v643
    %691 = vmatprep.subr.bf16.mxu0 0
    %692 = vmatpush1.bf16.msra.mxu0 %v644
    %693 = vmatprep.mubr.bf16.mxu0 %v525
    %694 = vmatmul.mubr.bf16.gmra.mrb[0].mxu0 %v524
    %v695 = vpop.f32.mrb[0].mxu0
    %v696 = vadd.f32 %v563, %v695
    %v697 = vpop.f32.mrb[0].mxu0
    %v698 = vpop.f32.mrb[0].mxu0
    %v699 = vadd.f32 %v563, %v698
    %v700 = vpop.f32.mrb[0].mxu0
    %701 = vdwg.mxu0
    %v702 = vpack.c.bf16 %v699, %v696
    %v704 = vunpack.c.l.b16 %v702
    %v705 = vunpack.c.h.b16 %v702
    %v706 = vpack.c.b16 %v704, %v704
    %v707 = vpack.c.b16 %v705, %v705
    %710 = vst [vmem:[#allocation12] sm:$0xf] %v706
    %711 = vst [vmem:[#allocation12 + $0x4] sm:$0xf] %v707
    // Predicated region
    $region46: #{tpu_custom_call.1} parent=1 // pred_check
      _
    $region47: #{tpu_custom_call.1} parent=1 // pred_check_branch
      %713 = sbr.rel (0) target = $region49
    $region48: #{tpu_custom_call.1} parent=1 // pred_region
      %s715 = ssub.s32 128, 128
      %716 = vsyncadd [#allocation6], %s715
      %s717 = sshll.u32 [#allocation12], 4
      %s718 = int_to_ptr.vmem [resolvable:$true] %s717
      %723 = dma.vmem_to_hbm [thread:$0]  %s718, 128, %s8, [#allocation6], 64, 64, 4
    $region49: #{tpu_custom_call.1} parent=1 // pred_fallthru
      _
    // Predicated region
    $region50: #{tpu_custom_call.1} parent=1 // pred_check
      _
    $region51: #{tpu_custom_call.1} parent=1 // pred_check_branch
      %725 = sbr.rel (0) target = $region53
    $region52: #{tpu_custom_call.1} parent=1 // pred_region
      %726 = dma.done [#allocation6], 128
    $region53: #{tpu_custom_call.1} parent=1 // pred_fallthru
      _
    %727 = vsyncpa [#allocation5], 1
    %728 = vsyncpa [#allocation8], 1
    %729 = vsyncpa [#allocation11], 1
    %730 = vsyncpa [#allocation6], 1

</llo_original>
